<compile_context>
chip_gen: v5e
topology: v5e:2x2
jax: 0.10.0
libtpu: 0.0.40
codegen_flags: <defaults>
</compile_context>

<pallas_src>
import functools

import jax
import jax.numpy as jnp
from jax.experimental import pallas as pl
from jax.experimental.pallas import tpu as pltpu


def _ffn_hidden_dim(dim, hidden_dim, multiple_of, ffn_dim_multiplier):
    # replicate FeedForward.__init__ hidden_dim computation
    hidden_dim = int(2 * hidden_dim / 3)
    if ffn_dim_multiplier is not None:
        hidden_dim = int(ffn_dim_multiplier * hidden_dim)
    hidden_dim = multiple_of * ((hidden_dim + multiple_of - 1) // multiple_of)
    return hidden_dim


def _round_up(x, m):
    return ((x + m - 1) // m) * m


# ----------------------------------------------------------------------------- kernel ---


def _norm_ffn_residual_norm_kernel(h_ref, w13_ref, w2_ref, ffn_w_ref, attn_w_ref,
                                   o_ref, x_scr, acc_scr, *, eps, th, gate_dtype):
    """Grid = (token tiles, hidden tiles).  h/o blocks depend only on i -> stay resident
    across the k (hidden) reduction axis; weights stream per k."""
    k = pl.program_id(1)

    @pl.when(k == 0)
    def _init():
        # RMSNorm #1 (ffn_norm), computed once per token tile, cached as the bf16 MXU operand.
        h = h_ref[...].astype(jnp.float32)
        ms = jnp.mean(h * h, axis=-1, keepdims=True)
        x_scr[...] = (h * jax.lax.rsqrt(ms + eps) * ffn_w_ref[...]).astype(jnp.bfloat16)
        acc_scr[...] = jnp.zeros_like(acc_scr)

    # Fused gate/up matmul on this hidden tile: w13 tile columns are [w1_k | w3_k].
    x = x_scr[...]                                                  # (tm, D) bf16
    ab = jnp.dot(x, w13_ref[...], preferred_element_type=jnp.float32)   # (tm, 2*th) f32
    a = ab[:, :th].astype(gate_dtype)                               # lane-aligned split (th % 128 == 0)
    b = ab[:, th:].astype(gate_dtype)
    g = (a * jax.nn.sigmoid(a)) * b                                 # silu(a) * b
    acc_scr[...] += jnp.dot(g.astype(jnp.bfloat16), w2_ref[...],
                            preferred_element_type=jnp.float32)     # (tm, D) f32 accumulate

    @pl.when(k == pl.num_programs(1) - 1)
    def _finalize():
        # residual add on the pre-norm h (exact f32), then RMSNorm #2 (attn_norm).
        r = h_ref[...].astype(jnp.float32) + acc_scr[...]
        ms2 = jnp.mean(r * r, axis=-1, keepdims=True)
        o_ref[...] = (r * jax.lax.rsqrt(ms2 + eps) * attn_w_ref[...]).astype(o_ref.dtype)


# ---------------------------------------------------------------------------- wrapper ---


def _device_kind():
    try:
        return jax.devices()[0].device_kind.lower()
    except Exception:
        return ""


def _default_gate_dtype():
    # bf16 gating only where the VPU/EUP natively support bf16 (v6e / v7x); f32 elsewhere.
    kind = _device_kind()
    if "v6" in kind or "v7" in kind:
        return jnp.bfloat16
    return jnp.float32


def _default_vmem_limit_bytes():
    kind = _device_kind()
    if "v7" in kind:
        return 48 * 1024 * 1024    # v7x: 64 MiB/TC physical -> leave headroom
    return 100 * 1024 * 1024       # v5e / v6e: 128 MiB physical


def _choose_tm(M, desired):
    # tm must be a multiple of 8; ragged M is handled by zero-padding, never by shrinking
    # tm to an arbitrary divisor.
    desired = max(8, desired - desired % 8)
    if M >= desired:
        return desired
    return _round_up(M, 8)


def _choose_th(H, desired):
    # tile_h must be a multiple of 128 so the [gate | up] lane split is tile-aligned.
    desired = max(128, desired - desired % 128)
    return min(desired, _round_up(H, 128))


def _pack_weights(w1t, w3t, w2t, ffn_norm_w, attn_norm_w, tile_h):
    """Pad H to a tile multiple and interleave w1/w3 tiles so the k-th (D, 2*tile_h) block
    of the fused weight is exactly [w1_k | w3_k].  In production call this ONCE and cache."""
    D, H = w1t.shape
    Hp = _round_up(H, tile_h)
    nk = Hp // tile_h
    if Hp != H:
        pad = Hp - H
        w1t = jnp.pad(w1t, ((0, 0), (0, pad)))   # zero gate/up cols + zero w2 rows -> exact
        w3t = jnp.pad(w3t, ((0, 0), (0, pad)))
        w2t = jnp.pad(w2t, ((0, pad), (0, 0)))
    w13 = jnp.concatenate(
        [w1t.reshape(D, nk, tile_h), w3t.reshape(D, nk, tile_h)], axis=2,
    ).reshape(D, 2 * Hp).astype(jnp.bfloat16)                        # (D, 2*Hp)
    w2p = w2t.astype(jnp.bfloat16)                                   # (Hp, D)
    ffn_w2d = ffn_norm_w.reshape(1, D).astype(jnp.float32)
    attn_w2d = attn_norm_w.reshape(1, D).astype(jnp.float32)
    return w13, w2p, ffn_w2d, attn_w2d, Hp


def norm_ffn_residual_norm(h, ffn_norm_w, w1t, w3t, w2t, attn_norm_w, *,
                           eps=1e-6, tm=512, tile_h=512,
                           gate_dtype=None, vmem_limit_bytes=None):
    """h: (B, S, D) float32.  Returns (B, S, D).

    Per-generation guidance (once weights are H-tiled, tm sets arithmetic intensity):
      v6e: tm 512-1024, tile_h 512;  v7x: tm 384-512, tile_h 256-512 (tighter 64 MiB VMEM);
      v5e: tm >= 256, tile_h 256-512.
    """
    B, S, D = h.shape
    M = B * S
    H = w1t.shape[1]

    if gate_dtype is None:
        gate_dtype = _default_gate_dtype()
    if vmem_limit_bytes is None:
        vmem_limit_bytes = _default_vmem_limit_bytes()

    tm = _choose_tm(M, tm)
    tile_h = _choose_th(H, tile_h)

    # TODO(synk): for static model weights, hoist _pack_weights out of the per-token path
    # (it re-materializes the packed bf16 weights each call otherwise).
    w13, w2p, ffn_w2d, attn_w2d, Hp = _pack_weights(
        w1t, w3t, w2t, ffn_norm_w, attn_norm_w, tile_h)

    Mp = _round_up(M, tm)
    h2d = h.reshape(M, D)
    if Mp != M:
        h2d = jnp.pad(h2d, ((0, Mp - M), (0, 0)))   # zero rows stay zero under RMSNorm (no NaN)

    grid_m = Mp // tm
    grid_k = Hp // tile_h

    kernel = functools.partial(_norm_ffn_residual_norm_kernel,
                               eps=eps, th=tile_h, gate_dtype=gate_dtype)

    cost = pl.CostEstimate(
        flops=6 * Mp * D * Hp,                                    # three matmuls
        transcendentals=Mp * Hp + 2 * Mp,                         # sigmoid + rsqrt
        bytes_accessed=2 * Mp * D * 4 + grid_m * 3 * D * Hp * 2 + 2 * D * 4,
    )

    out2d = pl.pallas_call(
        kernel,
        out_shape=jax.ShapeDtypeStruct((Mp, D), h.dtype),
        grid_spec=pltpu.PrefetchScalarGridSpec(
            num_scalar_prefetch=0,
            grid=(grid_m, grid_k),
            in_specs=[
                pl.BlockSpec((tm, D), lambda i, k: (i, 0)),           # h tile (resident over k)
                pl.BlockSpec((D, 2 * tile_h), lambda i, k: (0, k)),   # [w1_k | w3_k] bf16
                pl.BlockSpec((tile_h, D), lambda i, k: (k, 0)),       # w2_k bf16
                pl.BlockSpec((1, D), lambda i, k: (0, 0)),            # ffn_norm weight
                pl.BlockSpec((1, D), lambda i, k: (0, 0)),            # attn_norm weight
            ],
            out_specs=pl.BlockSpec((tm, D), lambda i, k: (i, 0)),
            scratch_shapes=[
                pltpu.VMEM((tm, D), jnp.bfloat16),   # cached normalized x tile
                pltpu.VMEM((tm, D), jnp.float32),    # FFN output accumulator
            ],
        ),
        compiler_params=pltpu.CompilerParams(
            dimension_semantics=("parallel", "arbitrary"),   # tokens parallel, H reduction
            vmem_limit_bytes=vmem_limit_bytes,
        ),
        cost_estimate=cost,
    )(h2d, w13, w2p, ffn_w2d, attn_w2d)

    return out2d[:M].reshape(B, S, D)


# -------------------------------------------------------------------------- reference ---


def _reference(h, ffn_norm_w, w1t, w3t, w2t, attn_norm_w, eps=1e-6):
    def rms(x, w):
        ms = jnp.mean(x * x, axis=-1, keepdims=True)
        return x * jax.lax.rsqrt(ms + eps) * w
    x = rms(h, ffn_norm_w)
    a = x @ w1t
    b = x @ w3t
    y = (a * jax.nn.sigmoid(a) * b) @ w2t
    r = h + y
    return rms(r, attn_norm_w)


if __name__ == "__main__":
    key = jax.random.PRNGKey(0)

    def make_case(case_key, dim, hidden_cfg, multiple_of, batch, seq):
        hidden = _ffn_hidden_dim(dim, hidden_cfg, multiple_of, None)
        k_h, k1, k2, k3, kfw, kaw = jax.random.split(case_key, 6)
        h = jax.random.normal(k_h, (batch, seq, dim), jnp.float32)
        # nn.Linear weight is (out, in); store transposed so matmuls are x @ W.
        w1t = (0.02 * jax.random.normal(k1, (hidden, dim), jnp.float32)).T   # (dim, hidden)
        w3t = (0.02 * jax.random.normal(k3, (hidden, dim), jnp.float32)).T   # (dim, hidden)
        w2t = (0.02 * jax.random.normal(k2, (dim, hidden), jnp.float32)).T   # (hidden, dim)
        ffn_w = 1.0 + 0.1 * jax.random.normal(kfw, (dim,), jnp.float32)
        attn_w = 1.0 + 0.1 * jax.random.normal(kaw, (dim,), jnp.float32)
        return h, ffn_w, w1t, w3t, w2t, attn_w

    k1, k2 = jax.random.split(key)

    # Case 1: dim=128, H=256; M=192 tokens (ragged -> zero-padded to 256 at tm=128),
    # tile_h=128 -> grid (2 token tiles, 2 hidden tiles): exercises padding + K accumulation.
    args1 = make_case(k1, 128, 384, 32, 2, 96)
    out1 = jax.block_until_ready(
        norm_ffn_residual_norm(*args1, tm=128, tile_h=128))
    ref1 = _reference(*args1)
    assert out1.shape == args1[0].shape
    assert jnp.allclose(out1, ref1, atol=2e-2, rtol=2e-2), "case 1 mismatch vs reference"

    # Case 2: dim=128, H=160 (not a multiple of 128) -> hidden padded to the 256-wide tile.
    args2 = make_case(k2, 128, 240, 32, 1, 64)
    out2 = jax.block_until_ready(norm_ffn_residual_norm(*args2))
    ref2 = _reference(*args2)
    assert out2.shape == args2[0].shape
    assert jnp.allclose(out2, ref2, atol=2e-2, rtol=2e-2), "case 2 mismatch vs reference"

    print("KERNEL_OK")
</pallas_src>

<mosaic_0001>
module attributes {stable_mosaic.version = 11 : i64} {
  func.func @_norm_ffn_residual_norm_kernel(%arg0: i32, %arg1: i32, %arg2: memref<128x128xf32, #tpu.memory_space<vmem>>, %arg3: memref<128x256xbf16, #tpu.memory_space<vmem>>, %arg4: memref<128x128xbf16, #tpu.memory_space<vmem>>, %arg5: memref<1x128xf32, #tpu.memory_space<vmem>>, %arg6: memref<1x128xf32, #tpu.memory_space<vmem>>, %arg7: memref<128x128xf32, #tpu.memory_space<vmem>>, %arg8: memref<128x128xbf16, #tpu.memory_space<vmem>>, %arg9: memref<128x128xf32, #tpu.memory_space<vmem>>) attributes {dimension_semantics = [#tpu.dimension_semantics<parallel>, #tpu.dimension_semantics<arbitrary>], iteration_bounds = array<i64: 2, 2>, scalar_prefetch = 0 : i64, scratch_operands = 2 : i64, tpu.core_type = #tpu.core_type<tc>, window_params = [{transform_indices = @transform_0, window_bounds = array<i64: 128, 128>}, {transform_indices = @transform_1, window_bounds = array<i64: 128, 256>}, {transform_indices = @transform_2, window_bounds = array<i64: 128, 128>}, {pipeline_mode = #tpu.pipeline_mode<synchronous>, transform_indices = @transform_3, window_bounds = array<i64: 1, 128>}, {pipeline_mode = #tpu.pipeline_mode<synchronous>, transform_indices = @transform_4, window_bounds = array<i64: 1, 128>}, {transform_indices = @transform_5, window_bounds = array<i64: 128, 128>}]} {
    %c0_i32 = arith.constant 0 : i32
    %0 = arith.cmpi eq, %arg1, %c0_i32 : i32
    %1 = arith.extui %0 : i1 to i32
    %c0_i32_0 = arith.constant 0 : i32
    %2 = arith.cmpi ne, %1, %c0_i32_0 : i32
    scf.if %2 {
      %c0_13 = arith.constant 0 : index
      %c0_14 = arith.constant 0 : index
      %24 = vector.load %arg2[%c0_13, %c0_14] : memref<128x128xf32, #tpu.memory_space<vmem>>, vector<128x128xf32>
      %25 = arith.mulf %24, %24 : vector<128x128xf32>
      %cst_15 = arith.constant dense<0.000000e+00> : vector<128xf32>
      %26 = vector.multi_reduction <add>, %25, %cst_15 [1] : vector<128x128xf32> to vector<128xf32>
      %27 = vector.shape_cast %26 : vector<128xf32> to vector<128x1xf32>
      %cst_16 = arith.constant 1.280000e+02 : f32
      %28 = vector.broadcast %cst_16 : f32 to vector<128x1xf32>
      %29 = arith.divf %27, %28 : vector<128x1xf32>
      %cst_17 = arith.constant 9.99999997E-7 : f32
      %30 = vector.broadcast %cst_17 : f32 to vector<128x1xf32>
      %31 = arith.addf %29, %30 : vector<128x1xf32>
      %32 = math.rsqrt %31 : vector<128x1xf32>
      %33 = vector.broadcast %32 : vector<128x1xf32> to vector<128x128xf32>
      %34 = arith.mulf %24, %33 : vector<128x128xf32>
      %c0_18 = arith.constant 0 : index
      %c0_19 = arith.constant 0 : index
      %35 = vector.load %arg5[%c0_18, %c0_19] : memref<1x128xf32, #tpu.memory_space<vmem>>, vector<1x128xf32>
      %36 = vector.broadcast %35 : vector<1x128xf32> to vector<128x128xf32>
      %37 = arith.mulf %34, %36 : vector<128x128xf32>
      %38 = arith.truncf %37 : vector<128x128xf32> to vector<128x128xbf16>
      %c0_20 = arith.constant 0 : index
      %c0_21 = arith.constant 0 : index
      %39 = vector.load %arg8[%c0_20, %c0_21] : memref<128x128xbf16, #tpu.memory_space<vmem>>, vector<128x128xbf16>
      tpu.vector_store %arg8[%c0_20, %c0_21], %38 {strides = array<i32>} : memref<128x128xbf16, #tpu.memory_space<vmem>>, vector<128x128xbf16>,
      %cst_22 = arith.constant 0.000000e+00 : f32
      %40 = vector.broadcast %cst_22 : f32 to vector<128x128xf32>
      %c0_23 = arith.constant 0 : index
      %c0_24 = arith.constant 0 : index
      %41 = vector.load %arg9[%c0_23, %c0_24] : memref<128x128xf32, #tpu.memory_space<vmem>>, vector<128x128xf32>
      tpu.vector_store %arg9[%c0_23, %c0_24], %40 {strides = array<i32>} : memref<128x128xf32, #tpu.memory_space<vmem>>, vector<128x128xf32>,
    } else {
    }
    %c0 = arith.constant 0 : index
    %c0_1 = arith.constant 0 : index
    %3 = vector.load %arg8[%c0, %c0_1] : memref<128x128xbf16, #tpu.memory_space<vmem>>, vector<128x128xbf16>
    %c0_2 = arith.constant 0 : index
    %c0_3 = arith.constant 0 : index
    %4 = vector.load %arg3[%c0_2, %c0_3] : memref<128x256xbf16, #tpu.memory_space<vmem>>, vector<128x256xbf16>
    %cst = arith.constant dense<0.000000e+00> : vector<128x256xf32>
    %5 = tpu.matmul %3, %4, %cst {dimension_numbers = #tpu.dot_dimension_numbers<[1], [0], [0], [1], [0, 0, 1, 1], [], []>} : vector<128x128xbf16>, vector<128x256xbf16>, vector<128x256xf32> -> vector<128x256xf32>
    %6 = vector.extract_strided_slice %5 {offsets = [0, 0], sizes = [128, 128], strides = [1, 1]} : vector<128x256xf32> to vector<128x128xf32>
    %7 = vector.extract_strided_slice %5 {offsets = [0, 128], sizes = [128, 128], strides = [1, 1]} : vector<128x256xf32> to vector<128x128xf32>
    %8 = arith.negf %6 : vector<128x128xf32>
    %9 = math.exp %8 : vector<128x128xf32>
    %cst_4 = arith.constant 1.000000e+00 : f32
    %10 = vector.broadcast %cst_4 : f32 to vector<128x128xf32>
    %11 = arith.addf %10, %9 : vector<128x128xf32>
    %12 = arith.divf %10, %11 : vector<128x128xf32>
    %13 = arith.mulf %6, %12 : vector<128x128xf32>
    %14 = arith.mulf %13, %7 : vector<128x128xf32>
    %c0_5 = arith.constant 0 : index
    %c0_6 = arith.constant 0 : index
    %15 = vector.load %arg9[%c0_5, %c0_6] : memref<128x128xf32, #tpu.memory_space<vmem>>, vector<128x128xf32>
    %16 = arith.truncf %14 : vector<128x128xf32> to vector<128x128xbf16>
    %c0_7 = arith.constant 0 : index
    %c0_8 = arith.constant 0 : index
    %17 = vector.load %arg4[%c0_7, %c0_8] : memref<128x128xbf16, #tpu.memory_space<vmem>>, vector<128x128xbf16>
    %cst_9 = arith.constant dense<0.000000e+00> : vector<128x128xf32>
    %18 = tpu.matmul %16, %17, %cst_9 {dimension_numbers = #tpu.dot_dimension_numbers<[1], [0], [0], [1], [0, 0, 1, 1], [], []>} : vector<128x128xbf16>, vector<128x128xbf16>, vector<128x128xf32> -> vector<128x128xf32>
    %19 = arith.addf %15, %18 : vector<128x128xf32>
    %c0_10 = arith.constant 0 : index
    %c0_11 = arith.constant 0 : index
    %20 = vector.load %arg9[%c0_10, %c0_11] : memref<128x128xf32, #tpu.memory_space<vmem>>, vector<128x128xf32>
    tpu.vector_store %arg9[%c0_10, %c0_11], %19 {strides = array<i32>} : memref<128x128xf32, #tpu.memory_space<vmem>>, vector<128x128xf32>,
    %c1_i32 = arith.constant 1 : i32
    %21 = arith.cmpi eq, %arg1, %c1_i32 : i32
    %22 = arith.extui %21 : i1 to i32
    %c0_i32_12 = arith.constant 0 : i32
    %23 = arith.cmpi ne, %22, %c0_i32_12 : i32
    scf.if %23 {
      %c0_13 = arith.constant 0 : index
      %c0_14 = arith.constant 0 : index
      %24 = vector.load %arg2[%c0_13, %c0_14] : memref<128x128xf32, #tpu.memory_space<vmem>>, vector<128x128xf32>
      %c0_15 = arith.constant 0 : index
      %c0_16 = arith.constant 0 : index
      %25 = vector.load %arg9[%c0_15, %c0_16] : memref<128x128xf32, #tpu.memory_space<vmem>>, vector<128x128xf32>
      %26 = arith.addf %24, %25 : vector<128x128xf32>
      %27 = arith.mulf %26, %26 : vector<128x128xf32>
      %cst_17 = arith.constant dense<0.000000e+00> : vector<128xf32>
      %28 = vector.multi_reduction <add>, %27, %cst_17 [1] : vector<128x128xf32> to vector<128xf32>
      %29 = vector.shape_cast %28 : vector<128xf32> to vector<128x1xf32>
      %cst_18 = arith.constant 1.280000e+02 : f32
      %30 = vector.broadcast %cst_18 : f32 to vector<128x1xf32>
      %31 = arith.divf %29, %30 : vector<128x1xf32>
      %cst_19 = arith.constant 9.99999997E-7 : f32
      %32 = vector.broadcast %cst_19 : f32 to vector<128x1xf32>
      %33 = arith.addf %31, %32 : vector<128x1xf32>
      %34 = math.rsqrt %33 : vector<128x1xf32>
      %35 = vector.broadcast %34 : vector<128x1xf32> to vector<128x128xf32>
      %36 = arith.mulf %26, %35 : vector<128x128xf32>
      %c0_20 = arith.constant 0 : index
      %c0_21 = arith.constant 0 : index
      %37 = vector.load %arg6[%c0_20, %c0_21] : memref<1x128xf32, #tpu.memory_space<vmem>>, vector<1x128xf32>
      %38 = vector.broadcast %37 : vector<1x128xf32> to vector<128x128xf32>
      %39 = arith.mulf %36, %38 : vector<128x128xf32>
      %c0_22 = arith.constant 0 : index
      %c0_23 = arith.constant 0 : index
      %40 = vector.load %arg7[%c0_22, %c0_23] : memref<128x128xf32, #tpu.memory_space<vmem>>, vector<128x128xf32>
      tpu.vector_store %arg7[%c0_22, %c0_23], %39 {strides = array<i32>} : memref<128x128xf32, #tpu.memory_space<vmem>>, vector<128x128xf32>,
    } else {
    }
    return
  }
  func.func @transform_0(%arg0: i32, %arg1: i32) -> (i32, i32) {
    %c0_i32 = arith.constant 0 : i32
    %c0_i32_0 = arith.constant 0 : i32
    return %arg0, %c0_i32 : i32, i32
  }
  func.func @transform_1(%arg0: i32, %arg1: i32) -> (i32, i32) {
    %c0_i32 = arith.constant 0 : i32
    %c0_i32_0 = arith.constant 0 : i32
    return %c0_i32, %arg1 : i32, i32
  }
  func.func @transform_2(%arg0: i32, %arg1: i32) -> (i32, i32) {
    %c0_i32 = arith.constant 0 : i32
    %c0_i32_0 = arith.constant 0 : i32
    return %arg1, %c0_i32 : i32, i32
  }
  func.func @transform_3(%arg0: i32, %arg1: i32) -> (i32, i32) {
    %c0_i32 = arith.constant 0 : i32
    %c0_i32_0 = arith.constant 0 : i32
    %c0_i32_1 = arith.constant 0 : i32
    return %c0_i32, %c0_i32_0 : i32, i32
  }
  func.func @transform_4(%arg0: i32, %arg1: i32) -> (i32, i32) {
    %c0_i32 = arith.constant 0 : i32
    %c0_i32_0 = arith.constant 0 : i32
    %c0_i32_1 = arith.constant 0 : i32
    return %c0_i32, %c0_i32_0 : i32, i32
  }
  func.func @transform_5(%arg0: i32, %arg1: i32) -> (i32, i32) {
    %c0_i32 = arith.constant 0 : i32
    %c0_i32_0 = arith.constant 0 : i32
    return %arg0, %c0_i32 : i32, i32
  }
}

</mosaic_0001>

<llo_original>
// kernel: tpu_custom_call.1
$region0: #{tpu_custom_call.1}
  #allocation0 [shape = 'u32[]', space=smem, size = 0x4, offset = 0x4, fixed_abs, tag = 'smem constant byte address 0x4 - core index']
  #allocation1 [shape = 'u32[72,128]{1,0:T(1,128)}', space=vmem, size = 0x9000, scoped, tag = 'internal scratch']
  #allocation2 [shape = 'bf16[128,128]{1,0:T(8,128)(2,1)}', space=vmem, size = 0x8000, scoped, tag = 'scratch operand']
  #allocation3 [shape = 'f32[128,128]{1,0:T(8,128)}', space=vmem, size = 0x10000, scoped, tag = 'scratch operand']
  %s0 = inlined_call_operand.hbm [shape: f32[256,128], index: 0, kind: input, shape index: {}]
  %s1 = inlined_call_operand.hbm [shape: bf16[128,512], index: 1, kind: input, shape index: {}]
  %s2 = inlined_call_operand.hbm [shape: bf16[256,128], index: 2, kind: input, shape index: {}]
  %s3 = inlined_call_operand.vmem [shape: f32[1,128], index: 3, kind: input, shape index: {}]
  %s4 = inlined_call_operand.vmem [shape: f32[1,128], index: 4, kind: input, shape index: {}]
  %s5 = inlined_call_operand.hbm [shape: f32[256,128], index: 5, kind: output, shape index: {}]
  %s6 = sld [smem:[#allocation0]]
  $region73: #{tpu_custom_call.1} parent=0
    _
  %s8 = ssub.s32 1, %s6
  %s9 = scalar_select 0, %s8, %s6
  $region1: #{tpu_custom_call.1} parent=0
    #allocation4 [shape = 'u8[131072]{0}', space=vmem, size = 0x20000, scoped, tag = 'input window, operand 0']
    #allocation5 [shape = 's32[2]{0}', space=sflag, size = 0x8, scoped, tag = 'scoped memory for tpu_custom_call.1']
    #allocation6 [shape = 's32[2]{0}', space=sflag, size = 0x8, scoped, tag = 'scoped memory for tpu_custom_call.1']
    #allocation7 [shape = 'u8[131072]{0}', space=vmem, size = 0x20000, scoped, tag = 'input window, operand 1']
    #allocation8 [shape = 's32[2]{0}', space=sflag, size = 0x8, scoped, tag = 'scoped memory for tpu_custom_call.1']
    #allocation9 [shape = 'u8[65536]{0}', space=vmem, size = 0x10000, scoped, tag = 'input window, operand 2']
    #allocation10 [shape = 'u8[131072]{0}', space=vmem, size = 0x20000, scoped, tag = 'output window, operand 0']
    %10 = vsyncpa [#allocation5], 0
    %s11 = scalar_lea.sflag [#allocation5], 1
    %12 = vsyncpa %s11, 0
    %13 = vsyncpa [#allocation8], 0
    %s14 = scalar_lea.sflag [#allocation8], 1
    %15 = vsyncpa %s14, 0
    %16 = vsyncpa [#allocation6], 0
    %s17 = scalar_lea.sflag [#allocation6], 1
    %18 = vsyncpa %s17, 0
    loop: start=0, step=1, limit=6
    $region2: #{tpu_custom_call.1} parent=1 // loop_pre_header
      _
    $region3: #{tpu_custom_call.1} parent=1 // loop_header
      %s20 = sphi 0, %s24
      %p21 = scmp.ge.s32.totalorder %s20, 6
      %s27 = sphi 0, %s39
      %s28 = sphi 0, %s35
      %s29 = sphi 0, %s27
      %s30 = sphi 0, %s28
      %s31 = sphi 0, %s29
      %s32 = sphi 0, %s30
      %s42 = sphi 0, %s44
      %s45 = sphi 0, %s42
      %s46 = sphi 0, %s45
      %s62 = sphi 0, %s46
      %s68 = sphi 0, %s70
      %s71 = sphi 0, %s68
      %s72 = sphi 0, %s71
      %s88 = sphi 0, %s72
      %s94 = sphi 0, %s96
      %s97 = sphi 0, %s94
      %s98 = sphi 0, %s97
      %s114 = sphi 0, %s98
      %s118 = sphi 0, %s118
      %s120 = sphi 0, %s118
      %s121 = sphi 0, %s120
      %s135 = sphi 0, %s121
      %s139 = sphi 0, %s139
      %s141 = sphi 0, %s139
      %s142 = sphi 0, %s141
      %s156 = sphi 0, %s142
      %s162 = sphi 0, %s164
      %s165 = sphi 0, %s162
      %s166 = sphi 0, %s165
      %s182 = sphi 0, %s166
    $region4: #{tpu_custom_call.1} parent=1 // loop_header_branch
      %23 = sbr.rel (%p21) target = $region8
    $region5: #{tpu_custom_call.1} parent=1 // loop_body
      %s25 = ssub.s32 %s20, 1
      %s26 = ssub.s32 %s20, 2
      %s33 = sadd.s32 1, %s28
      %p34 = scmp.ge.s32.totalorder %s33, 2
      %s35 = scalar_select %p34, 0, %s33
      %s36 = sadd.s32 1, %s27
      %s37 = scalar_select %p34, %s36, %s27
      %p38 = scmp.ge.s32.totalorder %s37, 2
      %s39 = scalar_select %p38, 0, %s37
      %s40 = ssub.s32 %s27, %s39
      %p41 = scmp.eq.s32.totalorder %s40, 0
      %s43 = sadd.s32 %s42, 1
      %s44 = scalar_select %p41, %s42, %s43
      %p47 = pneg %p41
      %p48 = scmp.eq.s32.totalorder %s20, 3
      %p49 = por %p47, %p48
      %p50 = scmp.ne.s32.totalorder %s42, %s45
      %p51 = scmp.eq.s32.totalorder %s20, 0
      %p52 = por %p50, %p51
      %p53 = scmp.ne.s32.totalorder %s42, %s45
      %p54 = scmp.eq.s32.totalorder %s25, 3
      %p55 = por %p53, %p54
      %p56 = scmp.ne.s32.totalorder %s45, %s46
      %p57 = scmp.eq.s32.totalorder %s25, 0
      %p58 = por %p56, %p57
      %p59 = scmp.ne.s32.totalorder %s45, %s46
      %p60 = scmp.eq.s32.totalorder %s26, 3
      %p61 = por %p59, %p60
      %p63 = scmp.ne.s32.totalorder %s46, %s62
      %p64 = scmp.eq.s32.totalorder %s26, 0
      %p65 = por %p63, %p64
      %s66 = ssub.s32 %s28, %s35
      %p67 = scmp.eq.s32.totalorder %s66, 0
      %s69 = sadd.s32 %s68, 1
      %s70 = scalar_select %p67, %s68, %s69
      %p73 = pneg %p67
      %p74 = scmp.eq.s32.totalorder %s20, 3
      %p75 = por %p73, %p74
      %p76 = scmp.ne.s32.totalorder %s68, %s71
      %p77 = scmp.eq.s32.totalorder %s20, 0
      %p78 = por %p76, %p77
      %p79 = scmp.ne.s32.totalorder %s68, %s71
      %p80 = scmp.eq.s32.totalorder %s25, 3
      %p81 = por %p79, %p80
      %p82 = scmp.ne.s32.totalorder %s71, %s72
      %p83 = scmp.eq.s32.totalorder %s25, 0
      %p84 = por %p82, %p83
      %p85 = scmp.ne.s32.totalorder %s71, %s72
      %p86 = scmp.eq.s32.totalorder %s26, 3
      %p87 = por %p85, %p86
      %p89 = scmp.ne.s32.totalorder %s72, %s88
      %p90 = scmp.eq.s32.totalorder %s26, 0
      %p91 = por %p89, %p90
      %s92 = ssub.s32 %s28, %s35
      %p93 = scmp.eq.s32.totalorder %s92, 0
      %s95 = sadd.s32 %s94, 1
      %s96 = scalar_select %p93, %s94, %s95
      %p99 = pneg %p93
      %p100 = scmp.eq.s32.totalorder %s20, 3
      %p101 = por %p99, %p100
      %p102 = scmp.ne.s32.totalorder %s94, %s97
      %p103 = scmp.eq.s32.totalorder %s20, 0
      %p104 = por %p102, %p103
      %p105 = scmp.ne.s32.totalorder %s94, %s97
      %p106 = scmp.eq.s32.totalorder %s25, 3
      %p107 = por %p105, %p106
      %p108 = scmp.ne.s32.totalorder %s97, %s98
      %p109 = scmp.eq.s32.totalorder %s25, 0
      %p110 = por %p108, %p109
      %p111 = scmp.ne.s32.totalorder %s97, %s98
      %p112 = scmp.eq.s32.totalorder %s26, 3
      %p113 = por %p111, %p112
      %p115 = scmp.ne.s32.totalorder %s98, %s114
      %p116 = scmp.eq.s32.totalorder %s26, 0
      %p117 = por %p115, %p116
      %s119 = sadd.s32 %s118, 1
      %p122 = scmp.eq.s32.totalorder %s20, 3
      %p123 = scmp.ne.s32.totalorder %s118, %s120
      %p124 = scmp.eq.s32.totalorder %s20, 0
      %p125 = por %p123, %p124
      %p126 = scmp.ne.s32.totalorder %s118, %s120
      %p127 = scmp.eq.s32.totalorder %s25, 3
      %p128 = por %p126, %p127
      %p129 = scmp.ne.s32.totalorder %s120, %s121
      %p130 = scmp.eq.s32.totalorder %s25, 0
      %p131 = por %p129, %p130
      %p132 = scmp.ne.s32.totalorder %s120, %s121
      %p133 = scmp.eq.s32.totalorder %s26, 3
      %p134 = por %p132, %p133
      %p136 = scmp.ne.s32.totalorder %s121, %s135
      %p137 = scmp.eq.s32.totalorder %s26, 0
      %p138 = por %p136, %p137
      %s140 = sadd.s32 %s139, 1
      %p143 = scmp.eq.s32.totalorder %s20, 3
      %p144 = scmp.ne.s32.totalorder %s139, %s141
      %p145 = scmp.eq.s32.totalorder %s20, 0
      %p146 = por %p144, %p145
      %p147 = scmp.ne.s32.totalorder %s139, %s141
      %p148 = scmp.eq.s32.totalorder %s25, 3
      %p149 = por %p147, %p148
      %p150 = scmp.ne.s32.totalorder %s141, %s142
      %p151 = scmp.eq.s32.totalorder %s25, 0
      %p152 = por %p150, %p151
      %p153 = scmp.ne.s32.totalorder %s141, %s142
      %p154 = scmp.eq.s32.totalorder %s26, 3
      %p155 = por %p153, %p154
      %p157 = scmp.ne.s32.totalorder %s142, %s156
      %p158 = scmp.eq.s32.totalorder %s26, 0
      %p159 = por %p157, %p158
      %s160 = ssub.s32 %s27, %s39
      %p161 = scmp.eq.s32.totalorder %s160, 0
      %s163 = sadd.s32 %s162, 1
      %s164 = scalar_select %p161, %s162, %s163
      %p167 = pneg %p161
      %p168 = scmp.eq.s32.totalorder %s20, 3
      %p169 = por %p167, %p168
      %p170 = scmp.ne.s32.totalorder %s162, %s165
      %p171 = scmp.eq.s32.totalorder %s20, 0
      %p172 = por %p170, %p171
      %p173 = scmp.ne.s32.totalorder %s162, %s165
      %p174 = scmp.eq.s32.totalorder %s25, 3
      %p175 = por %p173, %p174
      %p176 = scmp.ne.s32.totalorder %s165, %s166
      %p177 = scmp.eq.s32.totalorder %s25, 0
      %p178 = por %p176, %p177
      %p179 = scmp.ne.s32.totalorder %s165, %s166
      %p180 = scmp.eq.s32.totalorder %s26, 3
      %p181 = por %p179, %p180
      %p183 = scmp.ne.s32.totalorder %s166, %s182
      %p184 = scmp.eq.s32.totalorder %s26, 0
      %p185 = por %p183, %p184
      %p186 = scmp.le.s32.totalorder 1, %s20
      %p187 = scmp.lt.s32.totalorder %s20, 5
      %p188 = pnand %p186, %p187
      %p189 = pneg %p188
      // Predicated region
      $region9: #{tpu_custom_call.1} parent=5 // pred_check
        _
      $region10: #{tpu_custom_call.1} parent=5 // pred_check_branch
        %191 = sbr.rel (%p188) target = $region12
      $region11: #{tpu_custom_call.1} parent=5 // pred_region
        %s192 = ssub.s32 %s20, 1
        // Predicated region
        $region13: #{tpu_custom_call.1} parent=11 // pred_check
          %p193 = pneg %p131
        $region14: #{tpu_custom_call.1} parent=11 // pred_check_branch
          %195 = sbr.rel (%p193) target = $region16
        $region15: #{tpu_custom_call.1} parent=11 // pred_region
          _
        $region16: #{tpu_custom_call.1} parent=11 // pred_fallthru
          _
        // Predicated region
        $region17: #{tpu_custom_call.1} parent=11 // pred_check
          %p196 = pneg %p152
        $region18: #{tpu_custom_call.1} parent=11 // pred_check_branch
          %198 = sbr.rel (%p196) target = $region20
        $region19: #{tpu_custom_call.1} parent=11 // pred_region
          _
        $region20: #{tpu_custom_call.1} parent=11 // pred_fallthru
          _
      $region12: #{tpu_custom_call.1} parent=5 // pred_fallthru
        _
      %p199 = scmp.lt.s32.totalorder %s20, 4
      // Predicated region
      $region21: #{tpu_custom_call.1} parent=5 // pred_check
        %p200 = pneg %p199
      $region22: #{tpu_custom_call.1} parent=5 // pred_check_branch
        %202 = sbr.rel (%p200) target = $region24
      $region23: #{tpu_custom_call.1} parent=5 // pred_region
        // Predicated region
        $region25: #{tpu_custom_call.1} parent=23 // pred_check
          %p203 = pneg %p52
        $region26: #{tpu_custom_call.1} parent=23 // pred_check_branch
          %205 = sbr.rel (%p203) target = $region28
        $region27: #{tpu_custom_call.1} parent=23 // pred_region
          %s206 = sand.u32 %s42, 1
          %s207 = scalar_lea.sflag [#allocation5], %s206
          %s208 = sand.u32 %s42, 1
          %s209 = smul.addr %s208, 128
          %s210 = scalar_lea.vmem [#allocation4], %s209
          %s211 = smul.u32 16, %s27
          %213 = vsyncadd %s207, 0
          %s214 = smul.addr %s211, 8
          %s215 = scalar_lea.hbm %s0, %s214
          %s216 = sshll.u32 %s215, 4
          %s217 = int_to_ptr.hbm [resolvable:$true] %s216
          %s218 = sshll.u32 %s210, 4
          %s219 = int_to_ptr.vmem [resolvable:$true] %s218
          %224 = dma.hbm_to_vmem [thread:$0]  %s217, 2048, %s219, %s207, 128, 128, 8
        $region28: #{tpu_custom_call.1} parent=23 // pred_fallthru
          _
        // Predicated region
        $region29: #{tpu_custom_call.1} parent=23 // pred_check
          %p225 = pneg %p78
        $region30: #{tpu_custom_call.1} parent=23 // pred_check_branch
          %227 = sbr.rel (%p225) target = $region32
        $region31: #{tpu_custom_call.1} parent=23 // pred_region
          %s228 = sand.u32 %s20, 1
          %s229 = scalar_lea.sflag [#allocation8], %s228
          %s230 = sand.u32 %s68, 1
          %s231 = smul.addr %s230, 128
          %s232 = scalar_lea.vmem [#allocation7], %s231
          %s233 = smul.u32 2, %s28
          %235 = vsyncadd %s229, 0
          %s236 = smul.addr %s233, 4
          %s237 = scalar_lea.hbm %s1, %s236
          %s238 = sshll.u32 %s237, 4
          %s239 = int_to_ptr.hbm [resolvable:$true] %s238
          %s240 = sshll.u32 %s232, 4
          %s241 = int_to_ptr.vmem [resolvable:$true] %s240
          %246 = dma.hbm_to_vmem [thread:$0]  %s239, 2048, %s241, %s229, 256, 128, 8
        $region32: #{tpu_custom_call.1} parent=23 // pred_fallthru
          _
        // Predicated region
        $region33: #{tpu_custom_call.1} parent=23 // pred_check
          %p247 = pneg %p104
        $region34: #{tpu_custom_call.1} parent=23 // pred_check_branch
          %249 = sbr.rel (%p247) target = $region36
        $region35: #{tpu_custom_call.1} parent=23 // pred_region
          %s250 = sand.u32 %s20, 1
          %s251 = scalar_lea.sflag [#allocation8], %s250
          %s252 = sand.u32 %s94, 1
          %s253 = smul.addr %s252, 64
          %s254 = scalar_lea.vmem [#allocation9], %s253
          %s255 = smul.u32 16, %s28
          %257 = vsyncadd %s251, 0
          %s258 = smul.addr %s255, 4
          %s259 = scalar_lea.hbm %s2, %s258
          %s260 = sshll.u32 %s259, 4
          %s261 = int_to_ptr.hbm [resolvable:$true] %s260
          %s262 = sshll.u32 %s254, 4
          %s263 = int_to_ptr.vmem [resolvable:$true] %s262
          %268 = dma.hbm_to_vmem [thread:$0]  %s261, 1024, %s263, %s251, 64, 64, 4
        $region36: #{tpu_custom_call.1} parent=23 // pred_fallthru
          _
      $region24: #{tpu_custom_call.1} parent=5 // pred_fallthru
        _
      %p269 = scmp.le.s32.totalorder 1, %s20
      %p270 = scmp.lt.s32.totalorder %s20, 5
      %p271 = pnand %p269, %p270
      %p272 = pneg %p271
      // Predicated region
      $region37: #{tpu_custom_call.1} parent=5 // pred_check
        _
      $region38: #{tpu_custom_call.1} parent=5 // pred_check_branch
        %274 = sbr.rel (%p271) target = $region40
      $region39: #{tpu_custom_call.1} parent=5 // pred_region
        %s275 = ssub.s32 %s20, 1
        %s276 = sand.u32 %s45, 1
        %s277 = scalar_lea.sflag [#allocation5], %s276
        %s278 = sand.u32 %s45, 1
        %s279 = smul.addr %s278, 128
        %s280 = scalar_lea.vmem [#allocation4], %s279
        // Predicated region
        $region41: #{tpu_custom_call.1} parent=39 // pred_check
          %p281 = pneg %p58
        $region42: #{tpu_custom_call.1} parent=39 // pred_check_branch
          %283 = sbr.rel (%p281) target = $region44
        $region43: #{tpu_custom_call.1} parent=39 // pred_region
          %285 = dma.done %s277, 2048
        $region44: #{tpu_custom_call.1} parent=39 // pred_fallthru
          _
        %s286 = sand.u32 %s25, 1
        %s287 = scalar_lea.sflag [#allocation8], %s286
        %s288 = sand.u32 %s71, 1
        %s289 = smul.addr %s288, 128
        %s290 = scalar_lea.vmem [#allocation7], %s289
        // Predicated region
        $region45: #{tpu_custom_call.1} parent=39 // pred_check
          %p291 = pneg %p84
        $region46: #{tpu_custom_call.1} parent=39 // pred_check_branch
          %293 = sbr.rel (%p291) target = $region48
        $region47: #{tpu_custom_call.1} parent=39 // pred_region
          %295 = dma.done %s287, 2048
        $region48: #{tpu_custom_call.1} parent=39 // pred_fallthru
          _
        %s296 = sand.u32 %s25, 1
        %s297 = scalar_lea.sflag [#allocation8], %s296
        %s298 = sand.u32 %s97, 1
        %s299 = smul.addr %s298, 64
        %s300 = scalar_lea.vmem [#allocation9], %s299
        // Predicated region
        $region49: #{tpu_custom_call.1} parent=39 // pred_check
          %p301 = pneg %p110
        $region50: #{tpu_custom_call.1} parent=39 // pred_check_branch
          %303 = sbr.rel (%p301) target = $region52
        $region51: #{tpu_custom_call.1} parent=39 // pred_region
          %305 = dma.done %s297, 1024
        $region52: #{tpu_custom_call.1} parent=39 // pred_fallthru
          _
        %s306 = sand.u32 %s45, 1
        %s307 = scalar_lea.sflag [#allocation5], %s306
        %s308 = sand.u32 %s45, 1
        %s309 = smul.addr %s308, 128
        %s310 = scalar_lea.vmem [#allocation4], %s309
        %p311 = pneg %p58
        %p312 = pneg %p55
        %s313 = sand.u32 %s25, 1
        %s314 = scalar_lea.sflag [#allocation8], %s313
        %s315 = sand.u32 %s71, 1
        %s316 = smul.addr %s315, 128
        %s317 = scalar_lea.vmem [#allocation7], %s316
        %p318 = pneg %p84
        %p319 = pneg %p81
        %s320 = sand.u32 %s25, 1
        %s321 = scalar_lea.sflag [#allocation8], %s320
        %s322 = sand.u32 %s97, 1
        %s323 = smul.addr %s322, 64
        %s324 = scalar_lea.vmem [#allocation9], %s323
        %p325 = pneg %p110
        %p326 = pneg %p107
        %p327 = pneg %p131
        %p328 = pneg %p128
        %p329 = pneg %p152
        %p330 = pneg %p149
        %p331 = pneg %p178
        %p332 = pneg %p175
        %s333 = sand.u32 %s165, 1
        %s334 = scalar_lea.sflag [#allocation6], %s333
        %s335 = sand.u32 %s165, 1
        %s336 = smul.addr %s335, 128
        %s337 = scalar_lea.vmem [#allocation10], %s336
        %s338 = smul.u32 16, %s29
        %s339 = smul.u32 2, %s30
        %s340 = smul.u32 16, %s30
        %s341 = smul.u32 16, %s29
        %p342 = scmp.eq.s32.totalorder %s30, 0
        // Predicated region
        $region53: #{tpu_custom_call.1} parent=39 // pred_check
          %p343 = pneg %p342
        $region54: #{tpu_custom_call.1} parent=39 // pred_check_branch
          %345 = sbr.rel (%p343) target = $region56
        $region55: #{tpu_custom_call.1} parent=39 // pred_region
          %v346 = vld [vmem:[%s280] sm:$0xff]
          %v347 = vld [vmem:[%s280 + $0x8] sm:$0xff]
          %v348 = vld [vmem:[%s280 + $0x10] sm:$0xff]
          %v349 = vld [vmem:[%s280 + $0x18] sm:$0xff]
          %v350 = vld [vmem:[%s280 + $0x20] sm:$0xff]
          %v351 = vld [vmem:[%s280 + $0x28] sm:$0xff]
          %v352 = vld [vmem:[%s280 + $0x30] sm:$0xff]
          %v353 = vld [vmem:[%s280 + $0x38] sm:$0xff]
          %v354 = vld [vmem:[%s280 + $0x40] sm:$0xff]
          %v355 = vld [vmem:[%s280 + $0x48] sm:$0xff]
          %v356 = vld [vmem:[%s280 + $0x50] sm:$0xff]
          %v357 = vld [vmem:[%s280 + $0x58] sm:$0xff]
          %v358 = vld [vmem:[%s280 + $0x60] sm:$0xff]
          %v359 = vld [vmem:[%s280 + $0x68] sm:$0xff]
          %v360 = vld [vmem:[%s280 + $0x70] sm:$0xff]
          %v361 = vld [vmem:[%s280 + $0x78] sm:$0xff]
          %v362 = vmul.f32 %v346, %v346
          %v363 = vmul.f32 %v347, %v347
          %v364 = vmul.f32 %v348, %v348
          %v365 = vmul.f32 %v349, %v349
          %v366 = vmul.f32 %v350, %v350
          %v367 = vmul.f32 %v351, %v351
          %v368 = vmul.f32 %v352, %v352
          %v369 = vmul.f32 %v353, %v353
          %v370 = vmul.f32 %v354, %v354
          %v371 = vmul.f32 %v355, %v355
          %v372 = vmul.f32 %v356, %v356
          %v373 = vmul.f32 %v357, %v357
          %v374 = vmul.f32 %v358, %v358
          %v375 = vmul.f32 %v359, %v359
          %v376 = vmul.f32 %v360, %v360
          %v377 = vmul.f32 %v361, %v361
          %378 = vadd.xlane.f32.xlu0 %v362
          %v379 = vpop.xlane.xlu0 %378
          %380 = vadd.xlane.f32.xlu0 %v363
          %v381 = vpop.xlane.xlu0 %380
          %382 = vadd.xlane.f32.xlu0 %v364
          %v383 = vpop.xlane.xlu0 %382
          %384 = vadd.xlane.f32.xlu0 %v365
          %v385 = vpop.xlane.xlu0 %384
          %386 = vadd.xlane.f32.xlu0 %v366
          %v387 = vpop.xlane.xlu0 %386
          %388 = vadd.xlane.f32.xlu0 %v367
          %v389 = vpop.xlane.xlu0 %388
          %390 = vadd.xlane.f32.xlu0 %v368
          %v391 = vpop.xlane.xlu0 %390
          %392 = vadd.xlane.f32.xlu0 %v369
          %v393 = vpop.xlane.xlu0 %392
          %394 = vadd.xlane.f32.xlu0 %v370
          %v395 = vpop.xlane.xlu0 %394
          %396 = vadd.xlane.f32.xlu0 %v371
          %v397 = vpop.xlane.xlu0 %396
          %398 = vadd.xlane.f32.xlu0 %v372
          %v399 = vpop.xlane.xlu0 %398
          %400 = vadd.xlane.f32.xlu0 %v373
          %v401 = vpop.xlane.xlu0 %400
          %402 = vadd.xlane.f32.xlu0 %v374
          %v403 = vpop.xlane.xlu0 %402
          %404 = vadd.xlane.f32.xlu0 %v375
          %v405 = vpop.xlane.xlu0 %404
          %406 = vadd.xlane.f32.xlu0 %v376
          %v407 = vpop.xlane.xlu0 %406
          %408 = vadd.xlane.f32.xlu0 %v377
          %v409 = vpop.xlane.xlu0 %408
          %v410 = vrcp.pop 128.0
          %v411 = vmul.f32 128.0, %v410
          %v412 = vsub.f32 1.0, %v411
          %v413 = vmul.f32 %v410, %v412
          %v414 = vadd.f32 %v410, %v413
          %vm415 = vweird.f32 %v410
          %v416 = vsel %vm415, %v410, %v414
          %v417 = vmul.f32 %v379, %v416
          %v418 = vmul.f32 %v381, %v416
          %v419 = vmul.f32 %v383, %v416
          %v420 = vmul.f32 %v385, %v416
          %v421 = vmul.f32 %v387, %v416
          %v422 = vmul.f32 %v389, %v416
          %v423 = vmul.f32 %v391, %v416
          %v424 = vmul.f32 %v393, %v416
          %v425 = vmul.f32 %v395, %v416
          %v426 = vmul.f32 %v397, %v416
          %v427 = vmul.f32 %v399, %v416
          %v428 = vmul.f32 %v401, %v416
          %v429 = vmul.f32 %v403, %v416
          %v430 = vmul.f32 %v405, %v416
          %v431 = vmul.f32 %v407, %v416
          %v432 = vmul.f32 %v409, %v416
          %v433 = vadd.f32 %v417, 1e-06
          %v434 = vadd.f32 %v418, 1e-06
          %v435 = vadd.f32 %v419, 1e-06
          %v436 = vadd.f32 %v420, 1e-06
          %v437 = vadd.f32 %v421, 1e-06
          %v438 = vadd.f32 %v422, 1e-06
          %v439 = vadd.f32 %v423, 1e-06
          %v440 = vadd.f32 %v424, 1e-06
          %v441 = vadd.f32 %v425, 1e-06
          %v442 = vadd.f32 %v426, 1e-06
          %v443 = vadd.f32 %v427, 1e-06
          %v444 = vadd.f32 %v428, 1e-06
          %v445 = vadd.f32 %v429, 1e-06
          %v446 = vadd.f32 %v430, 1e-06
          %v447 = vadd.f32 %v431, 1e-06
          %v448 = vadd.f32 %v432, 1e-06
          %v449 = vrsqrt.pop %v433
          %v450 = vmul.f32 %v449, %v433
          %v451 = vmul.f32 %v450, %v449
          %v452 = vmul.f32 0.5, %v451
          %v453 = vsub.f32 1.5, %v452
          %v454 = vmul.f32 %v449, %v453
          %vm455 = vweird.f32 %v433
          %vm456 = vweird.f32 %v449
          %vm457 = vmor %vm455, %vm456
          %v458 = vsel %vm457, %v449, %v454
          %v459 = vrsqrt.pop %v434
          %v460 = vmul.f32 %v459, %v434
          %v461 = vmul.f32 %v460, %v459
          %v462 = vmul.f32 0.5, %v461
          %v463 = vsub.f32 1.5, %v462
          %v464 = vmul.f32 %v459, %v463
          %vm465 = vweird.f32 %v434
          %vm466 = vweird.f32 %v459
          %vm467 = vmor %vm465, %vm466
          %v468 = vsel %vm467, %v459, %v464
          %v469 = vrsqrt.pop %v435
          %v470 = vmul.f32 %v469, %v435
          %v471 = vmul.f32 %v470, %v469
          %v472 = vmul.f32 0.5, %v471
          %v473 = vsub.f32 1.5, %v472
          %v474 = vmul.f32 %v469, %v473
          %vm475 = vweird.f32 %v435
          %vm476 = vweird.f32 %v469
          %vm477 = vmor %vm475, %vm476
          %v478 = vsel %vm477, %v469, %v474
          %v479 = vrsqrt.pop %v436
          %v480 = vmul.f32 %v479, %v436
          %v481 = vmul.f32 %v480, %v479
          %v482 = vmul.f32 0.5, %v481
          %v483 = vsub.f32 1.5, %v482
          %v484 = vmul.f32 %v479, %v483
          %vm485 = vweird.f32 %v436
          %vm486 = vweird.f32 %v479
          %vm487 = vmor %vm485, %vm486
          %v488 = vsel %vm487, %v479, %v484
          %v489 = vrsqrt.pop %v437
          %v490 = vmul.f32 %v489, %v437
          %v491 = vmul.f32 %v490, %v489
          %v492 = vmul.f32 0.5, %v491
          %v493 = vsub.f32 1.5, %v492
          %v494 = vmul.f32 %v489, %v493
          %vm495 = vweird.f32 %v437
          %vm496 = vweird.f32 %v489
          %vm497 = vmor %vm495, %vm496
          %v498 = vsel %vm497, %v489, %v494
          %v499 = vrsqrt.pop %v438
          %v500 = vmul.f32 %v499, %v438
          %v501 = vmul.f32 %v500, %v499
          %v502 = vmul.f32 0.5, %v501
          %v503 = vsub.f32 1.5, %v502
          %v504 = vmul.f32 %v499, %v503
          %vm505 = vweird.f32 %v438
          %vm506 = vweird.f32 %v499
          %vm507 = vmor %vm505, %vm506
          %v508 = vsel %vm507, %v499, %v504
          %v509 = vrsqrt.pop %v439
          %v510 = vmul.f32 %v509, %v439
          %v511 = vmul.f32 %v510, %v509
          %v512 = vmul.f32 0.5, %v511
          %v513 = vsub.f32 1.5, %v512
          %v514 = vmul.f32 %v509, %v513
          %vm515 = vweird.f32 %v439
          %vm516 = vweird.f32 %v509
          %vm517 = vmor %vm515, %vm516
          %v518 = vsel %vm517, %v509, %v514
          %v519 = vrsqrt.pop %v440
          %v520 = vmul.f32 %v519, %v440
          %v521 = vmul.f32 %v520, %v519
          %v522 = vmul.f32 0.5, %v521
          %v523 = vsub.f32 1.5, %v522
          %v524 = vmul.f32 %v519, %v523
          %vm525 = vweird.f32 %v440
          %vm526 = vweird.f32 %v519
          %vm527 = vmor %vm525, %vm526
          %v528 = vsel %vm527, %v519, %v524
          %v529 = vrsqrt.pop %v441
          %v530 = vmul.f32 %v529, %v441
          %v531 = vmul.f32 %v530, %v529
          %v532 = vmul.f32 0.5, %v531
          %v533 = vsub.f32 1.5, %v532
          %v534 = vmul.f32 %v529, %v533
          %vm535 = vweird.f32 %v441
          %vm536 = vweird.f32 %v529
          %vm537 = vmor %vm535, %vm536
          %v538 = vsel %vm537, %v529, %v534
          %v539 = vrsqrt.pop %v442
          %v540 = vmul.f32 %v539, %v442
          %v541 = vmul.f32 %v540, %v539
          %v542 = vmul.f32 0.5, %v541
          %v543 = vsub.f32 1.5, %v542
          %v544 = vmul.f32 %v539, %v543
          %vm545 = vweird.f32 %v442
          %vm546 = vweird.f32 %v539
          %vm547 = vmor %vm545, %vm546
          %v548 = vsel %vm547, %v539, %v544
          %v549 = vrsqrt.pop %v443
          %v550 = vmul.f32 %v549, %v443
          %v551 = vmul.f32 %v550, %v549
          %v552 = vmul.f32 0.5, %v551
          %v553 = vsub.f32 1.5, %v552
          %v554 = vmul.f32 %v549, %v553
          %vm555 = vweird.f32 %v443
          %vm556 = vweird.f32 %v549
          %vm557 = vmor %vm555, %vm556
          %v558 = vsel %vm557, %v549, %v554
          %v559 = vrsqrt.pop %v444
          %v560 = vmul.f32 %v559, %v444
          %v561 = vmul.f32 %v560, %v559
          %v562 = vmul.f32 0.5, %v561
          %v563 = vsub.f32 1.5, %v562
          %v564 = vmul.f32 %v559, %v563
          %vm565 = vweird.f32 %v444
          %vm566 = vweird.f32 %v559
          %vm567 = vmor %vm565, %vm566
          %v568 = vsel %vm567, %v559, %v564
          %v569 = vrsqrt.pop %v445
          %v570 = vmul.f32 %v569, %v445
          %v571 = vmul.f32 %v570, %v569
          %v572 = vmul.f32 0.5, %v571
          %v573 = vsub.f32 1.5, %v572
          %v574 = vmul.f32 %v569, %v573
          %vm575 = vweird.f32 %v445
          %vm576 = vweird.f32 %v569
          %vm577 = vmor %vm575, %vm576
          %v578 = vsel %vm577, %v569, %v574
          %v579 = vrsqrt.pop %v446
          %v580 = vmul.f32 %v579, %v446
          %v581 = vmul.f32 %v580, %v579
          %v582 = vmul.f32 0.5, %v581
          %v583 = vsub.f32 1.5, %v582
          %v584 = vmul.f32 %v579, %v583
          %vm585 = vweird.f32 %v446
          %vm586 = vweird.f32 %v579
          %vm587 = vmor %vm585, %vm586
          %v588 = vsel %vm587, %v579, %v584
          %v589 = vrsqrt.pop %v447
          %v590 = vmul.f32 %v589, %v447
          %v591 = vmul.f32 %v590, %v589
          %v592 = vmul.f32 0.5, %v591
          %v593 = vsub.f32 1.5, %v592
          %v594 = vmul.f32 %v589, %v593
          %vm595 = vweird.f32 %v447
          %vm596 = vweird.f32 %v589
          %vm597 = vmor %vm595, %vm596
          %v598 = vsel %vm597, %v589, %v594
          %v599 = vrsqrt.pop %v448
          %v600 = vmul.f32 %v599, %v448
          %v601 = vmul.f32 %v600, %v599
          %v602 = vmul.f32 0.5, %v601
          %v603 = vsub.f32 1.5, %v602
          %v604 = vmul.f32 %v599, %v603
          %vm605 = vweird.f32 %v448
          %vm606 = vweird.f32 %v599
          %vm607 = vmor %vm605, %vm606
          %v608 = vsel %vm607, %v599, %v604
          %v609 = vmul.f32 %v346, %v458
          %v610 = vmul.f32 %v347, %v468
          %v611 = vmul.f32 %v348, %v478
          %v612 = vmul.f32 %v349, %v488
          %v613 = vmul.f32 %v350, %v498
          %v614 = vmul.f32 %v351, %v508
          %v615 = vmul.f32 %v352, %v518
          %v616 = vmul.f32 %v353, %v528
          %v617 = vmul.f32 %v354, %v538
          %v618 = vmul.f32 %v355, %v548
          %v619 = vmul.f32 %v356, %v558
          %v620 = vmul.f32 %v357, %v568
          %v621 = vmul.f32 %v358, %v578
          %v622 = vmul.f32 %v359, %v588
          %v623 = vmul.f32 %v360, %v598
          %v624 = vmul.f32 %v361, %v608
          %v625 = vld [vmem:[%s3] sm:$0x1]
          %v627 = vperm.slane %v625, 0
          %v629 = vmul.f32 %v609, %v627
          %v630 = vmul.f32 %v610, %v627
          %v631 = vmul.f32 %v611, %v627
          %v632 = vmul.f32 %v612, %v627
          %v633 = vmul.f32 %v613, %v627
          %v634 = vmul.f32 %v614, %v627
          %v635 = vmul.f32 %v615, %v627
          %v636 = vmul.f32 %v616, %v627
          %v637 = vmul.f32 %v617, %v627
          %v638 = vmul.f32 %v618, %v627
          %v639 = vmul.f32 %v619, %v627
          %v640 = vmul.f32 %v620, %v627
          %v641 = vmul.f32 %v621, %v627
          %v642 = vmul.f32 %v622, %v627
          %v643 = vmul.f32 %v623, %v627
          %v644 = vmul.f32 %v624, %v627
          %v645 = vpack.c.bf16 %v629, %v629
          %v646 = vpack.c.bf16 %v630, %v630
          %v647 = vpack.c.bf16 %v631, %v631
          %v648 = vpack.c.bf16 %v632, %v632
          %v649 = vpack.c.bf16 %v633, %v633
          %v650 = vpack.c.bf16 %v634, %v634
          %v651 = vpack.c.bf16 %v635, %v635
          %v652 = vpack.c.bf16 %v636, %v636
          %v653 = vpack.c.bf16 %v637, %v637
          %v654 = vpack.c.bf16 %v638, %v638
          %v655 = vpack.c.bf16 %v639, %v639
          %v656 = vpack.c.bf16 %v640, %v640
          %v657 = vpack.c.bf16 %v641, %v641
          %v658 = vpack.c.bf16 %v642, %v642
          %v659 = vpack.c.bf16 %v643, %v643
          %v660 = vpack.c.bf16 %v644, %v644
          %661 = vst [vmem:[#allocation2] sm:$0xf] %v645
          %662 = vst [vmem:[#allocation2 + $0x4] sm:$0xf] %v646
          %663 = vst [vmem:[#allocation2 + $0x8] sm:$0xf] %v647
          %664 = vst [vmem:[#allocation2 + $0xc] sm:$0xf] %v648
          %665 = vst [vmem:[#allocation2 + $0x10] sm:$0xf] %v649
          %666 = vst [vmem:[#allocation2 + $0x14] sm:$0xf] %v650
          %667 = vst [vmem:[#allocation2 + $0x18] sm:$0xf] %v651
          %668 = vst [vmem:[#allocation2 + $0x1c] sm:$0xf] %v652
          %669 = vst [vmem:[#allocation2 + $0x20] sm:$0xf] %v653
          %670 = vst [vmem:[#allocation2 + $0x24] sm:$0xf] %v654
          %671 = vst [vmem:[#allocation2 + $0x28] sm:$0xf] %v655
          %672 = vst [vmem:[#allocation2 + $0x2c] sm:$0xf] %v656
          %673 = vst [vmem:[#allocation2 + $0x30] sm:$0xf] %v657
          %674 = vst [vmem:[#allocation2 + $0x34] sm:$0xf] %v658
          %675 = vst [vmem:[#allocation2 + $0x38] sm:$0xf] %v659
          %676 = vst [vmem:[#allocation2 + $0x3c] sm:$0xf] %v660
          %677 = vst [vmem:[#allocation3] sm:$0xff] 0.0
          %678 = vst [vmem:[#allocation3 + $0x8] sm:$0xff] 0.0
          %679 = vst [vmem:[#allocation3 + $0x10] sm:$0xff] 0.0
          %680 = vst [vmem:[#allocation3 + $0x18] sm:$0xff] 0.0
          %681 = vst [vmem:[#allocation3 + $0x20] sm:$0xff] 0.0
          %682 = vst [vmem:[#allocation3 + $0x28] sm:$0xff] 0.0
          %683 = vst [vmem:[#allocation3 + $0x30] sm:$0xff] 0.0
          %684 = vst [vmem:[#allocation3 + $0x38] sm:$0xff] 0.0
          %685 = vst [vmem:[#allocation3 + $0x40] sm:$0xff] 0.0
          %686 = vst [vmem:[#allocation3 + $0x48] sm:$0xff] 0.0
          %687 = vst [vmem:[#allocation3 + $0x50] sm:$0xff] 0.0
          %688 = vst [vmem:[#allocation3 + $0x58] sm:$0xff] 0.0
          %689 = vst [vmem:[#allocation3 + $0x60] sm:$0xff] 0.0
          %690 = vst [vmem:[#allocation3 + $0x68] sm:$0xff] 0.0
          %691 = vst [vmem:[#allocation3 + $0x70] sm:$0xff] 0.0
          %692 = vst [vmem:[#allocation3 + $0x78] sm:$0xff] 0.0
        $region56: #{tpu_custom_call.1} parent=39 // pred_fallthru
          _
        %v693 = vld [vmem:[#allocation2] sm:$0xf]
        %v694 = vld [vmem:[#allocation2 + $0x4] sm:$0xf]
        %v695 = vld [vmem:[#allocation2 + $0x8] sm:$0xf]
        %v696 = vld [vmem:[#allocation2 + $0xc] sm:$0xf]
        %v697 = vld [vmem:[#allocation2 + $0x10] sm:$0xf]
        %v698 = vld [vmem:[#allocation2 + $0x14] sm:$0xf]
        %v699 = vld [vmem:[#allocation2 + $0x18] sm:$0xf]
        %v700 = vld [vmem:[#allocation2 + $0x1c] sm:$0xf]
        %v701 = vld [vmem:[#allocation2 + $0x20] sm:$0xf]
        %v702 = vld [vmem:[#allocation2 + $0x24] sm:$0xf]
        %v703 = vld [vmem:[#allocation2 + $0x28] sm:$0xf]
        %v704 = vld [vmem:[#allocation2 + $0x2c] sm:$0xf]
        %v705 = vld [vmem:[#allocation2 + $0x30] sm:$0xf]
        %v706 = vld [vmem:[#allocation2 + $0x34] sm:$0xf]
        %v707 = vld [vmem:[#allocation2 + $0x38] sm:$0xf]
        %v708 = vld [vmem:[#allocation2 + $0x3c] sm:$0xf]
        %v709 = vld [vmem:[%s290] sm:$0xff]
        %v710 = vld [vmem:[%s290 + $0x8] sm:$0xff]
        %v711 = vld [vmem:[%s290 + $0x10] sm:$0xff]
        %v712 = vld [vmem:[%s290 + $0x18] sm:$0xff]
        %v713 = vld [vmem:[%s290 + $0x20] sm:$0xff]
        %v714 = vld [vmem:[%s290 + $0x28] sm:$0xff]
        %v715 = vld [vmem:[%s290 + $0x30] sm:$0xff]
        %v716 = vld [vmem:[%s290 + $0x38] sm:$0xff]
        %v717 = vld [vmem:[%s290 + $0x40] sm:$0xff]
        %v718 = vld [vmem:[%s290 + $0x48] sm:$0xff]
        %v719 = vld [vmem:[%s290 + $0x50] sm:$0xff]
        %v720 = vld [vmem:[%s290 + $0x58] sm:$0xff]
        %v721 = vld [vmem:[%s290 + $0x60] sm:$0xff]
        %v722 = vld [vmem:[%s290 + $0x68] sm:$0xff]
        %v723 = vld [vmem:[%s290 + $0x70] sm:$0xff]
        %v724 = vld [vmem:[%s290 + $0x78] sm:$0xff]
        %v741 = vunpack.c.l.b16 %v693
        %v742 = vunpack.c.l.b16 %v694
        %v743 = vunpack.c.l.b16 %v695
        %v744 = vunpack.c.l.b16 %v696
        %v745 = vunpack.c.l.b16 %v697
        %v746 = vunpack.c.l.b16 %v698
        %v747 = vunpack.c.l.b16 %v699
        %v748 = vunpack.c.l.b16 %v700
        %v749 = vunpack.c.l.b16 %v701
        %v750 = vunpack.c.l.b16 %v702
        %v751 = vunpack.c.l.b16 %v703
        %v752 = vunpack.c.l.b16 %v704
        %v753 = vunpack.c.l.b16 %v705
        %v754 = vunpack.c.l.b16 %v706
        %v755 = vunpack.c.l.b16 %v707
        %v756 = vunpack.c.l.b16 %v708
        %v757 = vpack.c.b16 %v742, %v741
        %v758 = vpack.c.b16 %v744, %v743
        %v759 = vpack.c.b16 %v746, %v745
        %v760 = vpack.c.b16 %v748, %v747
        %v761 = vpack.c.b16 %v750, %v749
        %v762 = vpack.c.b16 %v752, %v751
        %v763 = vpack.c.b16 %v754, %v753
        %v764 = vpack.c.b16 %v756, %v755
        %v789 = vunpack.c.l.b16 %v709
        %v790 = vunpack.c.h.b16 %v709
        %v791 = vunpack.c.l.b16 %v710
        %v792 = vunpack.c.h.b16 %v710
        %v793 = vunpack.c.l.b16 %v711
        %v794 = vunpack.c.h.b16 %v711
        %v795 = vunpack.c.l.b16 %v712
        %v796 = vunpack.c.h.b16 %v712
        %v797 = vunpack.c.l.b16 %v713
        %v798 = vunpack.c.h.b16 %v713
        %v799 = vunpack.c.l.b16 %v714
        %v800 = vunpack.c.h.b16 %v714
        %v801 = vunpack.c.l.b16 %v715
        %v802 = vunpack.c.h.b16 %v715
        %v803 = vunpack.c.l.b16 %v716
        %v804 = vunpack.c.h.b16 %v716
        %v805 = vunpack.c.l.b16 %v717
        %v806 = vunpack.c.h.b16 %v717
        %v807 = vunpack.c.l.b16 %v718
        %v808 = vunpack.c.h.b16 %v718
        %v809 = vunpack.c.l.b16 %v719
        %v810 = vunpack.c.h.b16 %v719
        %v811 = vunpack.c.l.b16 %v720
        %v812 = vunpack.c.h.b16 %v720
        %v813 = vunpack.c.l.b16 %v721
        %v814 = vunpack.c.h.b16 %v721
        %v815 = vunpack.c.l.b16 %v722
        %v816 = vunpack.c.h.b16 %v722
        %v817 = vunpack.c.l.b16 %v723
        %v818 = vunpack.c.h.b16 %v723
        %v819 = vunpack.c.l.b16 %v724
        %v820 = vunpack.c.h.b16 %v724
        %v821 = vpack.c.b16 %v791, %v789
        %v822 = vpack.c.b16 %v792, %v790
        %v823 = vpack.c.b16 %v795, %v793
        %v824 = vpack.c.b16 %v796, %v794
        %v825 = vpack.c.b16 %v799, %v797
        %v826 = vpack.c.b16 %v800, %v798
        %v827 = vpack.c.b16 %v803, %v801
        %v828 = vpack.c.b16 %v804, %v802
        %v829 = vpack.c.b16 %v807, %v805
        %v830 = vpack.c.b16 %v808, %v806
        %v831 = vpack.c.b16 %v811, %v809
        %v832 = vpack.c.b16 %v812, %v810
        %v833 = vpack.c.b16 %v815, %v813
        %v834 = vpack.c.b16 %v816, %v814
        %v835 = vpack.c.b16 %v819, %v817
        %v836 = vpack.c.b16 %v820, %v818
        %853 = vmatpush.bf16.msra.mxu0 %v835
        %854 = vmatpush.bf16.msra.mxu0 %v833
        %855 = vmatpush.bf16.msra.mxu0 %v831
        %856 = vmatpush.bf16.msra.mxu0 %v829
        %857 = vmatpush.bf16.msra.mxu0 %v827
        %858 = vmatpush.bf16.msra.mxu0 %v825
        %859 = vmatpush.bf16.msra.mxu0 %v823
        %860 = vmatpush.bf16.msra.mxu0 %v821
        %861 = vmatmul.bf16.gmra.mxu0 %v757
        %v862 = vpop.f32.mrf.mxu0
        %v863 = vadd.f32 0.0, %v862
        %v864 = vpop.f32.mrf.mxu0
        %v865 = vadd.f32 0.0, %v864
        %866 = vmatmul.bf16.gmra.mxu0 %v758
        %v867 = vpop.f32.mrf.mxu0
        %v868 = vadd.f32 0.0, %v867
        %v869 = vpop.f32.mrf.mxu0
        %v870 = vadd.f32 0.0, %v869
        %871 = vmatmul.bf16.gmra.mxu0 %v759
        %v872 = vpop.f32.mrf.mxu0
        %v873 = vadd.f32 0.0, %v872
        %v874 = vpop.f32.mrf.mxu0
        %v875 = vadd.f32 0.0, %v874
        %876 = vmatmul.bf16.gmra.mxu0 %v760
        %v877 = vpop.f32.mrf.mxu0
        %v878 = vadd.f32 0.0, %v877
        %v879 = vpop.f32.mrf.mxu0
        %v880 = vadd.f32 0.0, %v879
        %881 = vmatmul.bf16.gmra.mxu0 %v761
        %v882 = vpop.f32.mrf.mxu0
        %v883 = vadd.f32 0.0, %v882
        %v884 = vpop.f32.mrf.mxu0
        %v885 = vadd.f32 0.0, %v884
        %886 = vmatmul.bf16.gmra.mxu0 %v762
        %v887 = vpop.f32.mrf.mxu0
        %v888 = vadd.f32 0.0, %v887
        %v889 = vpop.f32.mrf.mxu0
        %v890 = vadd.f32 0.0, %v889
        %891 = vmatmul.bf16.gmra.mxu0 %v763
        %v892 = vpop.f32.mrf.mxu0
        %v893 = vadd.f32 0.0, %v892
        %v894 = vpop.f32.mrf.mxu0
        %v895 = vadd.f32 0.0, %v894
        %896 = vmatmul.bf16.gmra.mxu0 %v764
        %v897 = vpop.f32.mrf.mxu0
        %v898 = vadd.f32 0.0, %v897
        %v899 = vpop.f32.mrf.mxu0
        %v900 = vadd.f32 0.0, %v899
        %901 = vdwg.mxu0
        %902 = vmatpush.bf16.msra.mxu0 %v836
        %903 = vmatpush.bf16.msra.mxu0 %v834
        %904 = vmatpush.bf16.msra.mxu0 %v832
        %905 = vmatpush.bf16.msra.mxu0 %v830
        %906 = vmatpush.bf16.msra.mxu0 %v828
        %907 = vmatpush.bf16.msra.mxu0 %v826
        %908 = vmatpush.bf16.msra.mxu0 %v824
        %909 = vmatpush.bf16.msra.mxu0 %v822
        %910 = vmatmul.bf16.gmra.mxu0 %v757
        %v911 = vpop.f32.mrf.mxu0
        %v912 = vadd.f32 0.0, %v911
        %v913 = vpop.f32.mrf.mxu0
        %v914 = vadd.f32 0.0, %v913
        %915 = vmatmul.bf16.gmra.mxu0 %v758
        %v916 = vpop.f32.mrf.mxu0
        %v917 = vadd.f32 0.0, %v916
        %v918 = vpop.f32.mrf.mxu0
        %v919 = vadd.f32 0.0, %v918
        %920 = vmatmul.bf16.gmra.mxu0 %v759
        %v921 = vpop.f32.mrf.mxu0
        %v922 = vadd.f32 0.0, %v921
        %v923 = vpop.f32.mrf.mxu0
        %v924 = vadd.f32 0.0, %v923
        %925 = vmatmul.bf16.gmra.mxu0 %v760
        %v926 = vpop.f32.mrf.mxu0
        %v927 = vadd.f32 0.0, %v926
        %v928 = vpop.f32.mrf.mxu0
        %v929 = vadd.f32 0.0, %v928
        %930 = vmatmul.bf16.gmra.mxu0 %v761
        %v931 = vpop.f32.mrf.mxu0
        %v932 = vadd.f32 0.0, %v931
        %v933 = vpop.f32.mrf.mxu0
        %v934 = vadd.f32 0.0, %v933
        %935 = vmatmul.bf16.gmra.mxu0 %v762
        %v936 = vpop.f32.mrf.mxu0
        %v937 = vadd.f32 0.0, %v936
        %v938 = vpop.f32.mrf.mxu0
        %v939 = vadd.f32 0.0, %v938
        %940 = vmatmul.bf16.gmra.mxu0 %v763
        %v941 = vpop.f32.mrf.mxu0
        %v942 = vadd.f32 0.0, %v941
        %v943 = vpop.f32.mrf.mxu0
        %v944 = vadd.f32 0.0, %v943
        %945 = vmatmul.bf16.gmra.mxu0 %v764
        %v946 = vpop.f32.mrf.mxu0
        %v947 = vadd.f32 0.0, %v946
        %v948 = vpop.f32.mrf.mxu0
        %v949 = vadd.f32 0.0, %v948
        %950 = vdwg.mxu0
        %v951 = vxor.u32 %v863, 2147483648
        %v952 = vxor.u32 %v865, 2147483648
        %v953 = vxor.u32 %v868, 2147483648
        %v954 = vxor.u32 %v870, 2147483648
        %v955 = vxor.u32 %v873, 2147483648
        %v956 = vxor.u32 %v875, 2147483648
        %v957 = vxor.u32 %v878, 2147483648
        %v958 = vxor.u32 %v880, 2147483648
        %v959 = vxor.u32 %v883, 2147483648
        %v960 = vxor.u32 %v885, 2147483648
        %v961 = vxor.u32 %v888, 2147483648
        %v962 = vxor.u32 %v890, 2147483648
        %v963 = vxor.u32 %v893, 2147483648
        %v964 = vxor.u32 %v895, 2147483648
        %v965 = vxor.u32 %v898, 2147483648
        %v966 = vxor.u32 %v900, 2147483648
        %v967 = vmul.f32 %v951, 1.442695
        %v968 = vpow.pop %v967
        %v969 = vmul.f32 %v952, 1.442695
        %v970 = vpow.pop %v969
        %v971 = vmul.f32 %v953, 1.442695
        %v972 = vpow.pop %v971
        %v973 = vmul.f32 %v954, 1.442695
        %v974 = vpow.pop %v973
        %v975 = vmul.f32 %v955, 1.442695
        %v976 = vpow.pop %v975
        %v977 = vmul.f32 %v956, 1.442695
        %v978 = vpow.pop %v977
        %v979 = vmul.f32 %v957, 1.442695
        %v980 = vpow.pop %v979
        %v981 = vmul.f32 %v958, 1.442695
        %v982 = vpow.pop %v981
        %v983 = vmul.f32 %v959, 1.442695
        %v984 = vpow.pop %v983
        %v985 = vmul.f32 %v960, 1.442695
        %v986 = vpow.pop %v985
        %v987 = vmul.f32 %v961, 1.442695
        %v988 = vpow.pop %v987
        %v989 = vmul.f32 %v962, 1.442695
        %v990 = vpow.pop %v989
        %v991 = vmul.f32 %v963, 1.442695
        %v992 = vpow.pop %v991
        %v993 = vmul.f32 %v964, 1.442695
        %v994 = vpow.pop %v993
        %v995 = vmul.f32 %v965, 1.442695
        %v996 = vpow.pop %v995
        %v997 = vmul.f32 %v966, 1.442695
        %v998 = vpow.pop %v997
        %v999 = vadd.f32 %v968, 1.0
        %v1000 = vadd.f32 %v970, 1.0
        %v1001 = vadd.f32 %v972, 1.0
        %v1002 = vadd.f32 %v974, 1.0
        %v1003 = vadd.f32 %v976, 1.0
        %v1004 = vadd.f32 %v978, 1.0
        %v1005 = vadd.f32 %v980, 1.0
        %v1006 = vadd.f32 %v982, 1.0
        %v1007 = vadd.f32 %v984, 1.0
        %v1008 = vadd.f32 %v986, 1.0
        %v1009 = vadd.f32 %v988, 1.0
        %v1010 = vadd.f32 %v990, 1.0
        %v1011 = vadd.f32 %v992, 1.0
        %v1012 = vadd.f32 %v994, 1.0
        %v1013 = vadd.f32 %v996, 1.0
        %v1014 = vadd.f32 %v998, 1.0
        %v1015 = vrcp.pop %v999
        %v1016 = vmul.f32 %v999, %v1015
        %v1017 = vsub.f32 1.0, %v1016
        %v1018 = vmul.f32 %v1015, %v1017
        %v1019 = vadd.f32 %v1015, %v1018
        %vm1020 = vweird.f32 %v999
        %vm1021 = vweird.f32 %v1015
        %vm1022 = vmor %vm1020, %vm1021
        %v1023 = vsel %vm1022, %v1015, %v1019
        %v1024 = vand.u32 2147483647, %v999
        %vm1025 = vcmp.eq.f32.partialorder %v1024, 8.507059e+37
        %v1026 = vand.u32 %v999, 2147483648
        %v1027 = vor.u32 1.1754944e-38, %v1026
        %v1028 = vsel %vm1025, %v1027, %v1023
        %v1029 = vmul.f32 1.0, %v1028
        %v1030 = vrcp.pop %v1000
        %v1031 = vmul.f32 %v1000, %v1030
        %v1032 = vsub.f32 1.0, %v1031
        %v1033 = vmul.f32 %v1030, %v1032
        %v1034 = vadd.f32 %v1030, %v1033
        %vm1035 = vweird.f32 %v1000
        %vm1036 = vweird.f32 %v1030
        %vm1037 = vmor %vm1035, %vm1036
        %v1038 = vsel %vm1037, %v1030, %v1034
        %v1039 = vand.u32 2147483647, %v1000
        %vm1040 = vcmp.eq.f32.partialorder %v1039, 8.507059e+37
        %v1041 = vand.u32 %v1000, 2147483648
        %v1042 = vor.u32 1.1754944e-38, %v1041
        %v1043 = vsel %vm1040, %v1042, %v1038
        %v1044 = vmul.f32 1.0, %v1043
        %v1045 = vrcp.pop %v1001
        %v1046 = vmul.f32 %v1001, %v1045
        %v1047 = vsub.f32 1.0, %v1046
        %v1048 = vmul.f32 %v1045, %v1047
        %v1049 = vadd.f32 %v1045, %v1048
        %vm1050 = vweird.f32 %v1001
        %vm1051 = vweird.f32 %v1045
        %vm1052 = vmor %vm1050, %vm1051
        %v1053 = vsel %vm1052, %v1045, %v1049
        %v1054 = vand.u32 2147483647, %v1001
        %vm1055 = vcmp.eq.f32.partialorder %v1054, 8.507059e+37
        %v1056 = vand.u32 %v1001, 2147483648
        %v1057 = vor.u32 1.1754944e-38, %v1056
        %v1058 = vsel %vm1055, %v1057, %v1053
        %v1059 = vmul.f32 1.0, %v1058
        %v1060 = vrcp.pop %v1002
        %v1061 = vmul.f32 %v1002, %v1060
        %v1062 = vsub.f32 1.0, %v1061
        %v1063 = vmul.f32 %v1060, %v1062
        %v1064 = vadd.f32 %v1060, %v1063
        %vm1065 = vweird.f32 %v1002
        %vm1066 = vweird.f32 %v1060
        %vm1067 = vmor %vm1065, %vm1066
        %v1068 = vsel %vm1067, %v1060, %v1064
        %v1069 = vand.u32 2147483647, %v1002
        %vm1070 = vcmp.eq.f32.partialorder %v1069, 8.507059e+37
        %v1071 = vand.u32 %v1002, 2147483648
        %v1072 = vor.u32 1.1754944e-38, %v1071
        %v1073 = vsel %vm1070, %v1072, %v1068
        %v1074 = vmul.f32 1.0, %v1073
        %v1075 = vrcp.pop %v1003
        %v1076 = vmul.f32 %v1003, %v1075
        %v1077 = vsub.f32 1.0, %v1076
        %v1078 = vmul.f32 %v1075, %v1077
        %v1079 = vadd.f32 %v1075, %v1078
        %vm1080 = vweird.f32 %v1003
        %vm1081 = vweird.f32 %v1075
        %vm1082 = vmor %vm1080, %vm1081
        %v1083 = vsel %vm1082, %v1075, %v1079
        %v1084 = vand.u32 2147483647, %v1003
        %vm1085 = vcmp.eq.f32.partialorder %v1084, 8.507059e+37
        %v1086 = vand.u32 %v1003, 2147483648
        %v1087 = vor.u32 1.1754944e-38, %v1086
        %v1088 = vsel %vm1085, %v1087, %v1083
        %v1089 = vmul.f32 1.0, %v1088
        %v1090 = vrcp.pop %v1004
        %v1091 = vmul.f32 %v1004, %v1090
        %v1092 = vsub.f32 1.0, %v1091
        %v1093 = vmul.f32 %v1090, %v1092
        %v1094 = vadd.f32 %v1090, %v1093
        %vm1095 = vweird.f32 %v1004
        %vm1096 = vweird.f32 %v1090
        %vm1097 = vmor %vm1095, %vm1096
        %v1098 = vsel %vm1097, %v1090, %v1094
        %v1099 = vand.u32 2147483647, %v1004
        %vm1100 = vcmp.eq.f32.partialorder %v1099, 8.507059e+37
        %v1101 = vand.u32 %v1004, 2147483648
        %v1102 = vor.u32 1.1754944e-38, %v1101
        %v1103 = vsel %vm1100, %v1102, %v1098
        %v1104 = vmul.f32 1.0, %v1103
        %v1105 = vrcp.pop %v1005
        %v1106 = vmul.f32 %v1005, %v1105
        %v1107 = vsub.f32 1.0, %v1106
        %v1108 = vmul.f32 %v1105, %v1107
        %v1109 = vadd.f32 %v1105, %v1108
        %vm1110 = vweird.f32 %v1005
        %vm1111 = vweird.f32 %v1105
        %vm1112 = vmor %vm1110, %vm1111
        %v1113 = vsel %vm1112, %v1105, %v1109
        %v1114 = vand.u32 2147483647, %v1005
        %vm1115 = vcmp.eq.f32.partialorder %v1114, 8.507059e+37
        %v1116 = vand.u32 %v1005, 2147483648
        %v1117 = vor.u32 1.1754944e-38, %v1116
        %v1118 = vsel %vm1115, %v1117, %v1113
        %v1119 = vmul.f32 1.0, %v1118
        %v1120 = vrcp.pop %v1006
        %v1121 = vmul.f32 %v1006, %v1120
        %v1122 = vsub.f32 1.0, %v1121
        %v1123 = vmul.f32 %v1120, %v1122
        %v1124 = vadd.f32 %v1120, %v1123
        %vm1125 = vweird.f32 %v1006
        %vm1126 = vweird.f32 %v1120
        %vm1127 = vmor %vm1125, %vm1126
        %v1128 = vsel %vm1127, %v1120, %v1124
        %v1129 = vand.u32 2147483647, %v1006
        %vm1130 = vcmp.eq.f32.partialorder %v1129, 8.507059e+37
        %v1131 = vand.u32 %v1006, 2147483648
        %v1132 = vor.u32 1.1754944e-38, %v1131
        %v1133 = vsel %vm1130, %v1132, %v1128
        %v1134 = vmul.f32 1.0, %v1133
        %v1135 = vrcp.pop %v1007
        %v1136 = vmul.f32 %v1007, %v1135
        %v1137 = vsub.f32 1.0, %v1136
        %v1138 = vmul.f32 %v1135, %v1137
        %v1139 = vadd.f32 %v1135, %v1138
        %vm1140 = vweird.f32 %v1007
        %vm1141 = vweird.f32 %v1135
        %vm1142 = vmor %vm1140, %vm1141
        %v1143 = vsel %vm1142, %v1135, %v1139
        %v1144 = vand.u32 2147483647, %v1007
        %vm1145 = vcmp.eq.f32.partialorder %v1144, 8.507059e+37
        %v1146 = vand.u32 %v1007, 2147483648
        %v1147 = vor.u32 1.1754944e-38, %v1146
        %v1148 = vsel %vm1145, %v1147, %v1143
        %v1149 = vmul.f32 1.0, %v1148
        %v1150 = vrcp.pop %v1008
        %v1151 = vmul.f32 %v1008, %v1150
        %v1152 = vsub.f32 1.0, %v1151
        %v1153 = vmul.f32 %v1150, %v1152
        %v1154 = vadd.f32 %v1150, %v1153
        %vm1155 = vweird.f32 %v1008
        %vm1156 = vweird.f32 %v1150
        %vm1157 = vmor %vm1155, %vm1156
        %v1158 = vsel %vm1157, %v1150, %v1154
        %v1159 = vand.u32 2147483647, %v1008
        %vm1160 = vcmp.eq.f32.partialorder %v1159, 8.507059e+37
        %v1161 = vand.u32 %v1008, 2147483648
        %v1162 = vor.u32 1.1754944e-38, %v1161
        %v1163 = vsel %vm1160, %v1162, %v1158
        %v1164 = vmul.f32 1.0, %v1163
        %v1165 = vrcp.pop %v1009
        %v1166 = vmul.f32 %v1009, %v1165
        %v1167 = vsub.f32 1.0, %v1166
        %v1168 = vmul.f32 %v1165, %v1167
        %v1169 = vadd.f32 %v1165, %v1168
        %vm1170 = vweird.f32 %v1009
        %vm1171 = vweird.f32 %v1165
        %vm1172 = vmor %vm1170, %vm1171
        %v1173 = vsel %vm1172, %v1165, %v1169
        %v1174 = vand.u32 2147483647, %v1009
        %vm1175 = vcmp.eq.f32.partialorder %v1174, 8.507059e+37
        %v1176 = vand.u32 %v1009, 2147483648
        %v1177 = vor.u32 1.1754944e-38, %v1176
        %v1178 = vsel %vm1175, %v1177, %v1173
        %v1179 = vmul.f32 1.0, %v1178
        %v1180 = vrcp.pop %v1010
        %v1181 = vmul.f32 %v1010, %v1180
        %v1182 = vsub.f32 1.0, %v1181
        %v1183 = vmul.f32 %v1180, %v1182
        %v1184 = vadd.f32 %v1180, %v1183
        %vm1185 = vweird.f32 %v1010
        %vm1186 = vweird.f32 %v1180
        %vm1187 = vmor %vm1185, %vm1186
        %v1188 = vsel %vm1187, %v1180, %v1184
        %v1189 = vand.u32 2147483647, %v1010
        %vm1190 = vcmp.eq.f32.partialorder %v1189, 8.507059e+37
        %v1191 = vand.u32 %v1010, 2147483648
        %v1192 = vor.u32 1.1754944e-38, %v1191
        %v1193 = vsel %vm1190, %v1192, %v1188
        %v1194 = vmul.f32 1.0, %v1193
        %v1195 = vrcp.pop %v1011
        %v1196 = vmul.f32 %v1011, %v1195
        %v1197 = vsub.f32 1.0, %v1196
        %v1198 = vmul.f32 %v1195, %v1197
        %v1199 = vadd.f32 %v1195, %v1198
        %vm1200 = vweird.f32 %v1011
        %vm1201 = vweird.f32 %v1195
        %vm1202 = vmor %vm1200, %vm1201
        %v1203 = vsel %vm1202, %v1195, %v1199
        %v1204 = vand.u32 2147483647, %v1011
        %vm1205 = vcmp.eq.f32.partialorder %v1204, 8.507059e+37
        %v1206 = vand.u32 %v1011, 2147483648
        %v1207 = vor.u32 1.1754944e-38, %v1206
        %v1208 = vsel %vm1205, %v1207, %v1203
        %v1209 = vmul.f32 1.0, %v1208
        %v1210 = vrcp.pop %v1012
        %v1211 = vmul.f32 %v1012, %v1210
        %v1212 = vsub.f32 1.0, %v1211
        %v1213 = vmul.f32 %v1210, %v1212
        %v1214 = vadd.f32 %v1210, %v1213
        %vm1215 = vweird.f32 %v1012
        %vm1216 = vweird.f32 %v1210
        %vm1217 = vmor %vm1215, %vm1216
        %v1218 = vsel %vm1217, %v1210, %v1214
        %v1219 = vand.u32 2147483647, %v1012
        %vm1220 = vcmp.eq.f32.partialorder %v1219, 8.507059e+37
        %v1221 = vand.u32 %v1012, 2147483648
        %v1222 = vor.u32 1.1754944e-38, %v1221
        %v1223 = vsel %vm1220, %v1222, %v1218
        %v1224 = vmul.f32 1.0, %v1223
        %v1225 = vrcp.pop %v1013
        %v1226 = vmul.f32 %v1013, %v1225
        %v1227 = vsub.f32 1.0, %v1226
        %v1228 = vmul.f32 %v1225, %v1227
        %v1229 = vadd.f32 %v1225, %v1228
        %vm1230 = vweird.f32 %v1013
        %vm1231 = vweird.f32 %v1225
        %vm1232 = vmor %vm1230, %vm1231
        %v1233 = vsel %vm1232, %v1225, %v1229
        %v1234 = vand.u32 2147483647, %v1013
        %vm1235 = vcmp.eq.f32.partialorder %v1234, 8.507059e+37
        %v1236 = vand.u32 %v1013, 2147483648
        %v1237 = vor.u32 1.1754944e-38, %v1236
        %v1238 = vsel %vm1235, %v1237, %v1233
        %v1239 = vmul.f32 1.0, %v1238
        %v1240 = vrcp.pop %v1014
        %v1241 = vmul.f32 %v1014, %v1240
        %v1242 = vsub.f32 1.0, %v1241
        %v1243 = vmul.f32 %v1240, %v1242
        %v1244 = vadd.f32 %v1240, %v1243
        %vm1245 = vweird.f32 %v1014
        %vm1246 = vweird.f32 %v1240
        %vm1247 = vmor %vm1245, %vm1246
        %v1248 = vsel %vm1247, %v1240, %v1244
        %v1249 = vand.u32 2147483647, %v1014
        %vm1250 = vcmp.eq.f32.partialorder %v1249, 8.507059e+37
        %v1251 = vand.u32 %v1014, 2147483648
        %v1252 = vor.u32 1.1754944e-38, %v1251
        %v1253 = vsel %vm1250, %v1252, %v1248
        %v1254 = vmul.f32 1.0, %v1253
        %v1255 = vmul.f32 %v863, %v1029
        %v1256 = vmul.f32 %v865, %v1044
        %v1257 = vmul.f32 %v868, %v1059
        %v1258 = vmul.f32 %v870, %v1074
        %v1259 = vmul.f32 %v873, %v1089
        %v1260 = vmul.f32 %v875, %v1104
        %v1261 = vmul.f32 %v878, %v1119
        %v1262 = vmul.f32 %v880, %v1134
        %v1263 = vmul.f32 %v883, %v1149
        %v1264 = vmul.f32 %v885, %v1164
        %v1265 = vmul.f32 %v888, %v1179
        %v1266 = vmul.f32 %v890, %v1194
        %v1267 = vmul.f32 %v893, %v1209
        %v1268 = vmul.f32 %v895, %v1224
        %v1269 = vmul.f32 %v898, %v1239
        %v1270 = vmul.f32 %v900, %v1254
        %v1271 = vmul.f32 %v1255, %v912
        %v1272 = vmul.f32 %v1256, %v914
        %v1273 = vmul.f32 %v1257, %v917
        %v1274 = vmul.f32 %v1258, %v919
        %v1275 = vmul.f32 %v1259, %v922
        %v1276 = vmul.f32 %v1260, %v924
        %v1277 = vmul.f32 %v1261, %v927
        %v1278 = vmul.f32 %v1262, %v929
        %v1279 = vmul.f32 %v1263, %v932
        %v1280 = vmul.f32 %v1264, %v934
        %v1281 = vmul.f32 %v1265, %v937
        %v1282 = vmul.f32 %v1266, %v939
        %v1283 = vmul.f32 %v1267, %v942
        %v1284 = vmul.f32 %v1268, %v944
        %v1285 = vmul.f32 %v1269, %v947
        %v1286 = vmul.f32 %v1270, %v949
        %v1287 = vld [vmem:[#allocation3] sm:$0xff]
        %v1288 = vld [vmem:[#allocation3 + $0x8] sm:$0xff]
        %v1289 = vld [vmem:[#allocation3 + $0x10] sm:$0xff]
        %v1290 = vld [vmem:[#allocation3 + $0x18] sm:$0xff]
        %v1291 = vld [vmem:[#allocation3 + $0x20] sm:$0xff]
        %v1292 = vld [vmem:[#allocation3 + $0x28] sm:$0xff]
        %v1293 = vld [vmem:[#allocation3 + $0x30] sm:$0xff]
        %v1294 = vld [vmem:[#allocation3 + $0x38] sm:$0xff]
        %v1295 = vld [vmem:[#allocation3 + $0x40] sm:$0xff]
        %v1296 = vld [vmem:[#allocation3 + $0x48] sm:$0xff]
        %v1297 = vld [vmem:[#allocation3 + $0x50] sm:$0xff]
        %v1298 = vld [vmem:[#allocation3 + $0x58] sm:$0xff]
        %v1299 = vld [vmem:[#allocation3 + $0x60] sm:$0xff]
        %v1300 = vld [vmem:[#allocation3 + $0x68] sm:$0xff]
        %v1301 = vld [vmem:[#allocation3 + $0x70] sm:$0xff]
        %v1302 = vld [vmem:[#allocation3 + $0x78] sm:$0xff]
        %v1303 = vpack.c.bf16 %v1272, %v1271
        %v1304 = vpack.c.bf16 %v1274, %v1273
        %v1305 = vpack.c.bf16 %v1276, %v1275
        %v1306 = vpack.c.bf16 %v1278, %v1277
        %v1307 = vpack.c.bf16 %v1280, %v1279
        %v1308 = vpack.c.bf16 %v1282, %v1281
        %v1309 = vpack.c.bf16 %v1284, %v1283
        %v1310 = vpack.c.bf16 %v1286, %v1285
        %v1311 = vld [vmem:[%s300] sm:$0xf]
        %v1312 = vld [vmem:[%s300 + $0x4] sm:$0xf]
        %v1313 = vld [vmem:[%s300 + $0x8] sm:$0xf]
        %v1314 = vld [vmem:[%s300 + $0xc] sm:$0xf]
        %v1315 = vld [vmem:[%s300 + $0x10] sm:$0xf]
        %v1316 = vld [vmem:[%s300 + $0x14] sm:$0xf]
        %v1317 = vld [vmem:[%s300 + $0x18] sm:$0xf]
        %v1318 = vld [vmem:[%s300 + $0x1c] sm:$0xf]
        %v1319 = vld [vmem:[%s300 + $0x20] sm:$0xf]
        %v1320 = vld [vmem:[%s300 + $0x24] sm:$0xf]
        %v1321 = vld [vmem:[%s300 + $0x28] sm:$0xf]
        %v1322 = vld [vmem:[%s300 + $0x2c] sm:$0xf]
        %v1323 = vld [vmem:[%s300 + $0x30] sm:$0xf]
        %v1324 = vld [vmem:[%s300 + $0x34] sm:$0xf]
        %v1325 = vld [vmem:[%s300 + $0x38] sm:$0xf]
        %v1326 = vld [vmem:[%s300 + $0x3c] sm:$0xf]
        %v1343 = vunpack.c.l.b16 %v1311
        %v1344 = vunpack.c.l.b16 %v1312
        %v1345 = vunpack.c.l.b16 %v1313
        %v1346 = vunpack.c.l.b16 %v1314
        %v1347 = vunpack.c.l.b16 %v1315
        %v1348 = vunpack.c.l.b16 %v1316
        %v1349 = vunpack.c.l.b16 %v1317
        %v1350 = vunpack.c.l.b16 %v1318
        %v1351 = vunpack.c.l.b16 %v1319
        %v1352 = vunpack.c.l.b16 %v1320
        %v1353 = vunpack.c.l.b16 %v1321
        %v1354 = vunpack.c.l.b16 %v1322
        %v1355 = vunpack.c.l.b16 %v1323
        %v1356 = vunpack.c.l.b16 %v1324
        %v1357 = vunpack.c.l.b16 %v1325
        %v1358 = vunpack.c.l.b16 %v1326
        %v1359 = vpack.c.b16 %v1344, %v1343
        %v1360 = vpack.c.b16 %v1346, %v1345
        %v1361 = vpack.c.b16 %v1348, %v1347
        %v1362 = vpack.c.b16 %v1350, %v1349
        %v1363 = vpack.c.b16 %v1352, %v1351
        %v1364 = vpack.c.b16 %v1354, %v1353
        %v1365 = vpack.c.b16 %v1356, %v1355
        %v1366 = vpack.c.b16 %v1358, %v1357
        %1375 = vmatpush.bf16.msra.mxu0 %v1366
        %1376 = vmatpush.bf16.msra.mxu0 %v1365
        %1377 = vmatpush.bf16.msra.mxu0 %v1364
        %1378 = vmatpush.bf16.msra.mxu0 %v1363
        %1379 = vmatpush.bf16.msra.mxu0 %v1362
        %1380 = vmatpush.bf16.msra.mxu0 %v1361
        %1381 = vmatpush.bf16.msra.mxu0 %v1360
        %1382 = vmatpush.bf16.msra.mxu0 %v1359
        %1383 = vmatmul.bf16.gmra.mxu0 %v1303
        %v1384 = vpop.f32.mrf.mxu0
        %v1385 = vadd.f32 0.0, %v1384
        %v1386 = vpop.f32.mrf.mxu0
        %v1387 = vadd.f32 0.0, %v1386
        %1388 = vmatmul.bf16.gmra.mxu0 %v1304
        %v1389 = vpop.f32.mrf.mxu0
        %v1390 = vadd.f32 0.0, %v1389
        %v1391 = vpop.f32.mrf.mxu0
        %v1392 = vadd.f32 0.0, %v1391
        %1393 = vmatmul.bf16.gmra.mxu0 %v1305
        %v1394 = vpop.f32.mrf.mxu0
        %v1395 = vadd.f32 0.0, %v1394
        %v1396 = vpop.f32.mrf.mxu0
        %v1397 = vadd.f32 0.0, %v1396
        %1398 = vmatmul.bf16.gmra.mxu0 %v1306
        %v1399 = vpop.f32.mrf.mxu0
        %v1400 = vadd.f32 0.0, %v1399
        %v1401 = vpop.f32.mrf.mxu0
        %v1402 = vadd.f32 0.0, %v1401
        %1403 = vmatmul.bf16.gmra.mxu0 %v1307
        %v1404 = vpop.f32.mrf.mxu0
        %v1405 = vadd.f32 0.0, %v1404
        %v1406 = vpop.f32.mrf.mxu0
        %v1407 = vadd.f32 0.0, %v1406
        %1408 = vmatmul.bf16.gmra.mxu0 %v1308
        %v1409 = vpop.f32.mrf.mxu0
        %v1410 = vadd.f32 0.0, %v1409
        %v1411 = vpop.f32.mrf.mxu0
        %v1412 = vadd.f32 0.0, %v1411
        %1413 = vmatmul.bf16.gmra.mxu0 %v1309
        %v1414 = vpop.f32.mrf.mxu0
        %v1415 = vadd.f32 0.0, %v1414
        %v1416 = vpop.f32.mrf.mxu0
        %v1417 = vadd.f32 0.0, %v1416
        %1418 = vmatmul.bf16.gmra.mxu0 %v1310
        %v1419 = vpop.f32.mrf.mxu0
        %v1420 = vadd.f32 0.0, %v1419
        %v1421 = vpop.f32.mrf.mxu0
        %v1422 = vadd.f32 0.0, %v1421
        %1423 = vdwg.mxu0
        %v1424 = vadd.f32 %v1287, %v1385
        %v1425 = vadd.f32 %v1288, %v1387
        %v1426 = vadd.f32 %v1289, %v1390
        %v1427 = vadd.f32 %v1290, %v1392
        %v1428 = vadd.f32 %v1291, %v1395
        %v1429 = vadd.f32 %v1292, %v1397
        %v1430 = vadd.f32 %v1293, %v1400
        %v1431 = vadd.f32 %v1294, %v1402
        %v1432 = vadd.f32 %v1295, %v1405
        %v1433 = vadd.f32 %v1296, %v1407
        %v1434 = vadd.f32 %v1297, %v1410
        %v1435 = vadd.f32 %v1298, %v1412
        %v1436 = vadd.f32 %v1299, %v1415
        %v1437 = vadd.f32 %v1300, %v1417
        %v1438 = vadd.f32 %v1301, %v1420
        %v1439 = vadd.f32 %v1302, %v1422
        %1440 = vst [vmem:[#allocation3] sm:$0xff] %v1424
        %1441 = vst [vmem:[#allocation3 + $0x8] sm:$0xff] %v1425
        %1442 = vst [vmem:[#allocation3 + $0x10] sm:$0xff] %v1426
        %1443 = vst [vmem:[#allocation3 + $0x18] sm:$0xff] %v1427
        %1444 = vst [vmem:[#allocation3 + $0x20] sm:$0xff] %v1428
        %1445 = vst [vmem:[#allocation3 + $0x28] sm:$0xff] %v1429
        %1446 = vst [vmem:[#allocation3 + $0x30] sm:$0xff] %v1430
        %1447 = vst [vmem:[#allocation3 + $0x38] sm:$0xff] %v1431
        %1448 = vst [vmem:[#allocation3 + $0x40] sm:$0xff] %v1432
        %1449 = vst [vmem:[#allocation3 + $0x48] sm:$0xff] %v1433
        %1450 = vst [vmem:[#allocation3 + $0x50] sm:$0xff] %v1434
        %1451 = vst [vmem:[#allocation3 + $0x58] sm:$0xff] %v1435
        %1452 = vst [vmem:[#allocation3 + $0x60] sm:$0xff] %v1436
        %1453 = vst [vmem:[#allocation3 + $0x68] sm:$0xff] %v1437
        %1454 = vst [vmem:[#allocation3 + $0x70] sm:$0xff] %v1438
        %1455 = vst [vmem:[#allocation3 + $0x78] sm:$0xff] %v1439
        %p1456 = scmp.eq.s32.totalorder %s30, 1
        // Predicated region
        $region57: #{tpu_custom_call.1} parent=39 // pred_check
          %p1457 = pneg %p1456
        $region58: #{tpu_custom_call.1} parent=39 // pred_check_branch
          %1459 = sbr.rel (%p1457) target = $region60
        $region59: #{tpu_custom_call.1} parent=39 // pred_region
          %v1460 = vld [vmem:[%s280] sm:$0xff]
          %v1461 = vld [vmem:[%s280 + $0x8] sm:$0xff]
          %v1462 = vld [vmem:[%s280 + $0x10] sm:$0xff]
          %v1463 = vld [vmem:[%s280 + $0x18] sm:$0xff]
          %v1464 = vld [vmem:[%s280 + $0x20] sm:$0xff]
          %v1465 = vld [vmem:[%s280 + $0x28] sm:$0xff]
          %v1466 = vld [vmem:[%s280 + $0x30] sm:$0xff]
          %v1467 = vld [vmem:[%s280 + $0x38] sm:$0xff]
          %v1468 = vld [vmem:[%s280 + $0x40] sm:$0xff]
          %v1469 = vld [vmem:[%s280 + $0x48] sm:$0xff]
          %v1470 = vld [vmem:[%s280 + $0x50] sm:$0xff]
          %v1471 = vld [vmem:[%s280 + $0x58] sm:$0xff]
          %v1472 = vld [vmem:[%s280 + $0x60] sm:$0xff]
          %v1473 = vld [vmem:[%s280 + $0x68] sm:$0xff]
          %v1474 = vld [vmem:[%s280 + $0x70] sm:$0xff]
          %v1475 = vld [vmem:[%s280 + $0x78] sm:$0xff]
          %v1476 = vld [vmem:[#allocation3] sm:$0xff]
          %v1477 = vld [vmem:[#allocation3 + $0x8] sm:$0xff]
          %v1478 = vld [vmem:[#allocation3 + $0x10] sm:$0xff]
          %v1479 = vld [vmem:[#allocation3 + $0x18] sm:$0xff]
          %v1480 = vld [vmem:[#allocation3 + $0x20] sm:$0xff]
          %v1481 = vld [vmem:[#allocation3 + $0x28] sm:$0xff]
          %v1482 = vld [vmem:[#allocation3 + $0x30] sm:$0xff]
          %v1483 = vld [vmem:[#allocation3 + $0x38] sm:$0xff]
          %v1484 = vld [vmem:[#allocation3 + $0x40] sm:$0xff]
          %v1485 = vld [vmem:[#allocation3 + $0x48] sm:$0xff]
          %v1486 = vld [vmem:[#allocation3 + $0x50] sm:$0xff]
          %v1487 = vld [vmem:[#allocation3 + $0x58] sm:$0xff]
          %v1488 = vld [vmem:[#allocation3 + $0x60] sm:$0xff]
          %v1489 = vld [vmem:[#allocation3 + $0x68] sm:$0xff]
          %v1490 = vld [vmem:[#allocation3 + $0x70] sm:$0xff]
          %v1491 = vld [vmem:[#allocation3 + $0x78] sm:$0xff]
          %v1492 = vadd.f32 %v1460, %v1476
          %v1493 = vadd.f32 %v1461, %v1477
          %v1494 = vadd.f32 %v1462, %v1478
          %v1495 = vadd.f32 %v1463, %v1479
          %v1496 = vadd.f32 %v1464, %v1480
          %v1497 = vadd.f32 %v1465, %v1481
          %v1498 = vadd.f32 %v1466, %v1482
          %v1499 = vadd.f32 %v1467, %v1483
          %v1500 = vadd.f32 %v1468, %v1484
          %v1501 = vadd.f32 %v1469, %v1485
          %v1502 = vadd.f32 %v1470, %v1486
          %v1503 = vadd.f32 %v1471, %v1487
          %v1504 = vadd.f32 %v1472, %v1488
          %v1505 = vadd.f32 %v1473, %v1489
          %v1506 = vadd.f32 %v1474, %v1490
          %v1507 = vadd.f32 %v1475, %v1491
          %v1508 = vmul.f32 %v1492, %v1492
          %v1509 = vmul.f32 %v1493, %v1493
          %v1510 = vmul.f32 %v1494, %v1494
          %v1511 = vmul.f32 %v1495, %v1495
          %v1512 = vmul.f32 %v1496, %v1496
          %v1513 = vmul.f32 %v1497, %v1497
          %v1514 = vmul.f32 %v1498, %v1498
          %v1515 = vmul.f32 %v1499, %v1499
          %v1516 = vmul.f32 %v1500, %v1500
          %v1517 = vmul.f32 %v1501, %v1501
          %v1518 = vmul.f32 %v1502, %v1502
          %v1519 = vmul.f32 %v1503, %v1503
          %v1520 = vmul.f32 %v1504, %v1504
          %v1521 = vmul.f32 %v1505, %v1505
          %v1522 = vmul.f32 %v1506, %v1506
          %v1523 = vmul.f32 %v1507, %v1507
          %1524 = vadd.xlane.f32.xlu0 %v1508
          %v1525 = vpop.xlane.xlu0 %1524
          %1526 = vadd.xlane.f32.xlu0 %v1509
          %v1527 = vpop.xlane.xlu0 %1526
          %1528 = vadd.xlane.f32.xlu0 %v1510
          %v1529 = vpop.xlane.xlu0 %1528
          %1530 = vadd.xlane.f32.xlu0 %v1511
          %v1531 = vpop.xlane.xlu0 %1530
          %1532 = vadd.xlane.f32.xlu0 %v1512
          %v1533 = vpop.xlane.xlu0 %1532
          %1534 = vadd.xlane.f32.xlu0 %v1513
          %v1535 = vpop.xlane.xlu0 %1534
          %1536 = vadd.xlane.f32.xlu0 %v1514
          %v1537 = vpop.xlane.xlu0 %1536
          %1538 = vadd.xlane.f32.xlu0 %v1515
          %v1539 = vpop.xlane.xlu0 %1538
          %1540 = vadd.xlane.f32.xlu0 %v1516
          %v1541 = vpop.xlane.xlu0 %1540
          %1542 = vadd.xlane.f32.xlu0 %v1517
          %v1543 = vpop.xlane.xlu0 %1542
          %1544 = vadd.xlane.f32.xlu0 %v1518
          %v1545 = vpop.xlane.xlu0 %1544
          %1546 = vadd.xlane.f32.xlu0 %v1519
          %v1547 = vpop.xlane.xlu0 %1546
          %1548 = vadd.xlane.f32.xlu0 %v1520
          %v1549 = vpop.xlane.xlu0 %1548
          %1550 = vadd.xlane.f32.xlu0 %v1521
          %v1551 = vpop.xlane.xlu0 %1550
          %1552 = vadd.xlane.f32.xlu0 %v1522
          %v1553 = vpop.xlane.xlu0 %1552
          %1554 = vadd.xlane.f32.xlu0 %v1523
          %v1555 = vpop.xlane.xlu0 %1554
          %v1556 = vrcp.pop 128.0
          %v1557 = vmul.f32 128.0, %v1556
          %v1558 = vsub.f32 1.0, %v1557
          %v1559 = vmul.f32 %v1556, %v1558
          %v1560 = vadd.f32 %v1556, %v1559
          %vm1561 = vweird.f32 %v1556
          %v1562 = vsel %vm1561, %v1556, %v1560
          %v1563 = vmul.f32 %v1525, %v1562
          %v1564 = vmul.f32 %v1527, %v1562
          %v1565 = vmul.f32 %v1529, %v1562
          %v1566 = vmul.f32 %v1531, %v1562
          %v1567 = vmul.f32 %v1533, %v1562
          %v1568 = vmul.f32 %v1535, %v1562
          %v1569 = vmul.f32 %v1537, %v1562
          %v1570 = vmul.f32 %v1539, %v1562
          %v1571 = vmul.f32 %v1541, %v1562
          %v1572 = vmul.f32 %v1543, %v1562
          %v1573 = vmul.f32 %v1545, %v1562
          %v1574 = vmul.f32 %v1547, %v1562
          %v1575 = vmul.f32 %v1549, %v1562
          %v1576 = vmul.f32 %v1551, %v1562
          %v1577 = vmul.f32 %v1553, %v1562
          %v1578 = vmul.f32 %v1555, %v1562
          %v1579 = vadd.f32 %v1563, 1e-06
          %v1580 = vadd.f32 %v1564, 1e-06
          %v1581 = vadd.f32 %v1565, 1e-06
          %v1582 = vadd.f32 %v1566, 1e-06
          %v1583 = vadd.f32 %v1567, 1e-06
          %v1584 = vadd.f32 %v1568, 1e-06
          %v1585 = vadd.f32 %v1569, 1e-06
          %v1586 = vadd.f32 %v1570, 1e-06
          %v1587 = vadd.f32 %v1571, 1e-06
          %v1588 = vadd.f32 %v1572, 1e-06
          %v1589 = vadd.f32 %v1573, 1e-06
          %v1590 = vadd.f32 %v1574, 1e-06
          %v1591 = vadd.f32 %v1575, 1e-06
          %v1592 = vadd.f32 %v1576, 1e-06
          %v1593 = vadd.f32 %v1577, 1e-06
          %v1594 = vadd.f32 %v1578, 1e-06
          %v1595 = vrsqrt.pop %v1579
          %v1596 = vmul.f32 %v1595, %v1579
          %v1597 = vmul.f32 %v1596, %v1595
          %v1598 = vmul.f32 0.5, %v1597
          %v1599 = vsub.f32 1.5, %v1598
          %v1600 = vmul.f32 %v1595, %v1599
          %vm1601 = vweird.f32 %v1579
          %vm1602 = vweird.f32 %v1595
          %vm1603 = vmor %vm1601, %vm1602
          %v1604 = vsel %vm1603, %v1595, %v1600
          %v1605 = vrsqrt.pop %v1580
          %v1606 = vmul.f32 %v1605, %v1580
          %v1607 = vmul.f32 %v1606, %v1605
          %v1608 = vmul.f32 0.5, %v1607
          %v1609 = vsub.f32 1.5, %v1608
          %v1610 = vmul.f32 %v1605, %v1609
          %vm1611 = vweird.f32 %v1580
          %vm1612 = vweird.f32 %v1605
          %vm1613 = vmor %vm1611, %vm1612
          %v1614 = vsel %vm1613, %v1605, %v1610
          %v1615 = vrsqrt.pop %v1581
          %v1616 = vmul.f32 %v1615, %v1581
          %v1617 = vmul.f32 %v1616, %v1615
          %v1618 = vmul.f32 0.5, %v1617
          %v1619 = vsub.f32 1.5, %v1618
          %v1620 = vmul.f32 %v1615, %v1619
          %vm1621 = vweird.f32 %v1581
          %vm1622 = vweird.f32 %v1615
          %vm1623 = vmor %vm1621, %vm1622
          %v1624 = vsel %vm1623, %v1615, %v1620
          %v1625 = vrsqrt.pop %v1582
          %v1626 = vmul.f32 %v1625, %v1582
          %v1627 = vmul.f32 %v1626, %v1625
          %v1628 = vmul.f32 0.5, %v1627
          %v1629 = vsub.f32 1.5, %v1628
          %v1630 = vmul.f32 %v1625, %v1629
          %vm1631 = vweird.f32 %v1582
          %vm1632 = vweird.f32 %v1625
          %vm1633 = vmor %vm1631, %vm1632
          %v1634 = vsel %vm1633, %v1625, %v1630
          %v1635 = vrsqrt.pop %v1583
          %v1636 = vmul.f32 %v1635, %v1583
          %v1637 = vmul.f32 %v1636, %v1635
          %v1638 = vmul.f32 0.5, %v1637
          %v1639 = vsub.f32 1.5, %v1638
          %v1640 = vmul.f32 %v1635, %v1639
          %vm1641 = vweird.f32 %v1583
          %vm1642 = vweird.f32 %v1635
          %vm1643 = vmor %vm1641, %vm1642
          %v1644 = vsel %vm1643, %v1635, %v1640
          %v1645 = vrsqrt.pop %v1584
          %v1646 = vmul.f32 %v1645, %v1584
          %v1647 = vmul.f32 %v1646, %v1645
          %v1648 = vmul.f32 0.5, %v1647
          %v1649 = vsub.f32 1.5, %v1648
          %v1650 = vmul.f32 %v1645, %v1649
          %vm1651 = vweird.f32 %v1584
          %vm1652 = vweird.f32 %v1645
          %vm1653 = vmor %vm1651, %vm1652
          %v1654 = vsel %vm1653, %v1645, %v1650
          %v1655 = vrsqrt.pop %v1585
          %v1656 = vmul.f32 %v1655, %v1585
          %v1657 = vmul.f32 %v1656, %v1655
          %v1658 = vmul.f32 0.5, %v1657
          %v1659 = vsub.f32 1.5, %v1658
          %v1660 = vmul.f32 %v1655, %v1659
          %vm1661 = vweird.f32 %v1585
          %vm1662 = vweird.f32 %v1655
          %vm1663 = vmor %vm1661, %vm1662
          %v1664 = vsel %vm1663, %v1655, %v1660
          %v1665 = vrsqrt.pop %v1586
          %v1666 = vmul.f32 %v1665, %v1586
          %v1667 = vmul.f32 %v1666, %v1665
          %v1668 = vmul.f32 0.5, %v1667
          %v1669 = vsub.f32 1.5, %v1668
          %v1670 = vmul.f32 %v1665, %v1669
          %vm1671 = vweird.f32 %v1586
          %vm1672 = vweird.f32 %v1665
          %vm1673 = vmor %vm1671, %vm1672
          %v1674 = vsel %vm1673, %v1665, %v1670
          %v1675 = vrsqrt.pop %v1587
          %v1676 = vmul.f32 %v1675, %v1587
          %v1677 = vmul.f32 %v1676, %v1675
          %v1678 = vmul.f32 0.5, %v1677
          %v1679 = vsub.f32 1.5, %v1678
          %v1680 = vmul.f32 %v1675, %v1679
          %vm1681 = vweird.f32 %v1587
          %vm1682 = vweird.f32 %v1675
          %vm1683 = vmor %vm1681, %vm1682
          %v1684 = vsel %vm1683, %v1675, %v1680
          %v1685 = vrsqrt.pop %v1588
          %v1686 = vmul.f32 %v1685, %v1588
          %v1687 = vmul.f32 %v1686, %v1685
          %v1688 = vmul.f32 0.5, %v1687
          %v1689 = vsub.f32 1.5, %v1688
          %v1690 = vmul.f32 %v1685, %v1689
          %vm1691 = vweird.f32 %v1588
          %vm1692 = vweird.f32 %v1685
          %vm1693 = vmor %vm1691, %vm1692
          %v1694 = vsel %vm1693, %v1685, %v1690
          %v1695 = vrsqrt.pop %v1589
          %v1696 = vmul.f32 %v1695, %v1589
          %v1697 = vmul.f32 %v1696, %v1695
          %v1698 = vmul.f32 0.5, %v1697
          %v1699 = vsub.f32 1.5, %v1698
          %v1700 = vmul.f32 %v1695, %v1699
          %vm1701 = vweird.f32 %v1589
          %vm1702 = vweird.f32 %v1695
          %vm1703 = vmor %vm1701, %vm1702
          %v1704 = vsel %vm1703, %v1695, %v1700
          %v1705 = vrsqrt.pop %v1590
          %v1706 = vmul.f32 %v1705, %v1590
          %v1707 = vmul.f32 %v1706, %v1705
          %v1708 = vmul.f32 0.5, %v1707
          %v1709 = vsub.f32 1.5, %v1708
          %v1710 = vmul.f32 %v1705, %v1709
          %vm1711 = vweird.f32 %v1590
          %vm1712 = vweird.f32 %v1705
          %vm1713 = vmor %vm1711, %vm1712
          %v1714 = vsel %vm1713, %v1705, %v1710
          %v1715 = vrsqrt.pop %v1591
          %v1716 = vmul.f32 %v1715, %v1591
          %v1717 = vmul.f32 %v1716, %v1715
          %v1718 = vmul.f32 0.5, %v1717
          %v1719 = vsub.f32 1.5, %v1718
          %v1720 = vmul.f32 %v1715, %v1719
          %vm1721 = vweird.f32 %v1591
          %vm1722 = vweird.f32 %v1715
          %vm1723 = vmor %vm1721, %vm1722
          %v1724 = vsel %vm1723, %v1715, %v1720
          %v1725 = vrsqrt.pop %v1592
          %v1726 = vmul.f32 %v1725, %v1592
          %v1727 = vmul.f32 %v1726, %v1725
          %v1728 = vmul.f32 0.5, %v1727
          %v1729 = vsub.f32 1.5, %v1728
          %v1730 = vmul.f32 %v1725, %v1729
          %vm1731 = vweird.f32 %v1592
          %vm1732 = vweird.f32 %v1725
          %vm1733 = vmor %vm1731, %vm1732
          %v1734 = vsel %vm1733, %v1725, %v1730
          %v1735 = vrsqrt.pop %v1593
          %v1736 = vmul.f32 %v1735, %v1593
          %v1737 = vmul.f32 %v1736, %v1735
          %v1738 = vmul.f32 0.5, %v1737
          %v1739 = vsub.f32 1.5, %v1738
          %v1740 = vmul.f32 %v1735, %v1739
          %vm1741 = vweird.f32 %v1593
          %vm1742 = vweird.f32 %v1735
          %vm1743 = vmor %vm1741, %vm1742
          %v1744 = vsel %vm1743, %v1735, %v1740
          %v1745 = vrsqrt.pop %v1594
          %v1746 = vmul.f32 %v1745, %v1594
          %v1747 = vmul.f32 %v1746, %v1745
          %v1748 = vmul.f32 0.5, %v1747
          %v1749 = vsub.f32 1.5, %v1748
          %v1750 = vmul.f32 %v1745, %v1749
          %vm1751 = vweird.f32 %v1594
          %vm1752 = vweird.f32 %v1745
          %vm1753 = vmor %vm1751, %vm1752
          %v1754 = vsel %vm1753, %v1745, %v1750
          %v1755 = vmul.f32 %v1492, %v1604
          %v1756 = vmul.f32 %v1493, %v1614
          %v1757 = vmul.f32 %v1494, %v1624
          %v1758 = vmul.f32 %v1495, %v1634
          %v1759 = vmul.f32 %v1496, %v1644
          %v1760 = vmul.f32 %v1497, %v1654
          %v1761 = vmul.f32 %v1498, %v1664
          %v1762 = vmul.f32 %v1499, %v1674
          %v1763 = vmul.f32 %v1500, %v1684
          %v1764 = vmul.f32 %v1501, %v1694
          %v1765 = vmul.f32 %v1502, %v1704
          %v1766 = vmul.f32 %v1503, %v1714
          %v1767 = vmul.f32 %v1504, %v1724
          %v1768 = vmul.f32 %v1505, %v1734
          %v1769 = vmul.f32 %v1506, %v1744
          %v1770 = vmul.f32 %v1507, %v1754
          %v1771 = vld [vmem:[%s4] sm:$0x1]
          %v1773 = vperm.slane %v1771, 0
          %v1775 = vmul.f32 %v1755, %v1773
          %v1776 = vmul.f32 %v1756, %v1773
          %v1777 = vmul.f32 %v1757, %v1773
          %v1778 = vmul.f32 %v1758, %v1773
          %v1779 = vmul.f32 %v1759, %v1773
          %v1780 = vmul.f32 %v1760, %v1773
          %v1781 = vmul.f32 %v1761, %v1773
          %v1782 = vmul.f32 %v1762, %v1773
          %v1783 = vmul.f32 %v1763, %v1773
          %v1784 = vmul.f32 %v1764, %v1773
          %v1785 = vmul.f32 %v1765, %v1773
          %v1786 = vmul.f32 %v1766, %v1773
          %v1787 = vmul.f32 %v1767, %v1773
          %v1788 = vmul.f32 %v1768, %v1773
          %v1789 = vmul.f32 %v1769, %v1773
          %v1790 = vmul.f32 %v1770, %v1773
          %1791 = vst [vmem:[%s337] sm:$0xff] %v1775
          %1792 = vst [vmem:[%s337 + $0x8] sm:$0xff] %v1776
          %1793 = vst [vmem:[%s337 + $0x10] sm:$0xff] %v1777
          %1794 = vst [vmem:[%s337 + $0x18] sm:$0xff] %v1778
          %1795 = vst [vmem:[%s337 + $0x20] sm:$0xff] %v1779
          %1796 = vst [vmem:[%s337 + $0x28] sm:$0xff] %v1780
          %1797 = vst [vmem:[%s337 + $0x30] sm:$0xff] %v1781
          %1798 = vst [vmem:[%s337 + $0x38] sm:$0xff] %v1782
          %1799 = vst [vmem:[%s337 + $0x40] sm:$0xff] %v1783
          %1800 = vst [vmem:[%s337 + $0x48] sm:$0xff] %v1784
          %1801 = vst [vmem:[%s337 + $0x50] sm:$0xff] %v1785
          %1802 = vst [vmem:[%s337 + $0x58] sm:$0xff] %v1786
          %1803 = vst [vmem:[%s337 + $0x60] sm:$0xff] %v1787
          %1804 = vst [vmem:[%s337 + $0x68] sm:$0xff] %v1788
          %1805 = vst [vmem:[%s337 + $0x70] sm:$0xff] %v1789
          %1806 = vst [vmem:[%s337 + $0x78] sm:$0xff] %v1790
        $region60: #{tpu_custom_call.1} parent=39 // pred_fallthru
          _
        %s1807 = sand.u32 %s165, 1
        %s1808 = scalar_lea.sflag [#allocation6], %s1807
        %s1809 = sand.u32 %s165, 1
        %s1810 = smul.addr %s1809, 128
        %s1811 = scalar_lea.vmem [#allocation10], %s1810
        // Predicated region
        $region61: #{tpu_custom_call.1} parent=39 // pred_check
          %p1812 = pneg %p175
        $region62: #{tpu_custom_call.1} parent=39 // pred_check_branch
          %1814 = sbr.rel (%p1812) target = $region64
        $region63: #{tpu_custom_call.1} parent=39 // pred_region
          %s1815 = smul.u32 16, %s29
          %1817 = vsyncadd %s1808, 0
          %s1818 = smul.addr %s1815, 8
          %s1819 = scalar_lea.hbm %s5, %s1818
          %s1820 = sshll.u32 %s1811, 4
          %s1821 = int_to_ptr.vmem [resolvable:$true] %s1820
          %s1822 = sshll.u32 %s1819, 4
          %s1823 = int_to_ptr.hbm [resolvable:$true] %s1822
          %1828 = dma.vmem_to_hbm [thread:$0]  %s1821, 2048, %s1823, %s1808, 128, 128, 8
        $region64: #{tpu_custom_call.1} parent=39 // pred_fallthru
          _
      $region40: #{tpu_custom_call.1} parent=5 // pred_fallthru
        _
      %p1829 = scmp.le.s32.totalorder 2, %s20
      // Predicated region
      $region65: #{tpu_custom_call.1} parent=5 // pred_check
        %p1830 = pneg %p1829
      $region66: #{tpu_custom_call.1} parent=5 // pred_check_branch
        %1832 = sbr.rel (%p1830) target = $region68
      $region67: #{tpu_custom_call.1} parent=5 // pred_region
        %s1833 = ssub.s32 %s20, 2
        // Predicated region
        $region69: #{tpu_custom_call.1} parent=67 // pred_check
          %p1834 = pneg %p181
        $region70: #{tpu_custom_call.1} parent=67 // pred_check_branch
          %1836 = sbr.rel (%p1834) target = $region72
        $region71: #{tpu_custom_call.1} parent=67 // pred_region
          %s1837 = sand.u32 %s166, 1
          %s1838 = scalar_lea.sflag [#allocation6], %s1837
          %s1839 = sand.u32 %s166, 1
          %s1840 = smul.addr %s1839, 128
          %s1841 = scalar_lea.vmem [#allocation10], %s1840
          %1843 = dma.done %s1838, 2048
        $region72: #{tpu_custom_call.1} parent=67 // pred_fallthru
          _
      $region68: #{tpu_custom_call.1} parent=5 // pred_fallthru
        _
    $region6: #{tpu_custom_call.1} parent=1 // loop_footer
      %s24 = sadd.s32 1, %s20
    $region7: #{tpu_custom_call.1} parent=1 // loop_footer_branch
      %19 = sbr.rel target = $region3
    $region8: #{tpu_custom_call.1} parent=1 // loop_exit
      _
    %1844 = vsyncpa [#allocation5], 1
    %s1845 = scalar_lea.sflag [#allocation5], 1
    %1846 = vsyncpa %s1845, 1
    %1847 = vsyncpa [#allocation8], 1
    %s1848 = scalar_lea.sflag [#allocation8], 1
    %1849 = vsyncpa %s1848, 1
    %1850 = vsyncpa [#allocation6], 1
    %s1851 = scalar_lea.sflag [#allocation6], 1
    %1852 = vsyncpa %s1851, 1

</llo_original>
